<compile_context>
chip_gen: v5e
topology: v5e:2x2
jax: 0.10.0
libtpu: 0.0.40
codegen_flags: <defaults>
</compile_context>

<pallas_src>
import math
import functools

import jax
import jax.numpy as jnp
from jax import lax
from jax.experimental import pallas as pl
from jax.experimental.pallas import tpu as pltpu

# ----------------------------- model dims -----------------------------------
B = 2            # batch
S = 8            # sequence length
D = 32           # d_model
H = 4            # num_heads
DEPTH = D // H   # per-head depth
FFN = 64         # ffn_dim
MAX_LEN = 16     # 'length' passed to the block (>= S)
EPS = 1e-5       # nn.LayerNorm default eps
F32 = jnp.float32
LANES = 128      # TPU vreg lane width


def _ilog2(n):
    assert n > 0 and (n & (n - 1)) == 0, "power-of-two size expected"
    return n.bit_length() - 1


def _layer_norm(x, gamma, beta):
    mu = jnp.mean(x, axis=-1, keepdims=True)
    var = jnp.mean((x - mu) ** 2, axis=-1, keepdims=True)
    return (x - mu) * lax.rsqrt(var + EPS) * gamma + beta


def _erf(y):
    # Abramowitz & Stegun 7.1.26 polynomial (|err| < 1.5e-7).  Uses only
    # abs/exp/mul/add/div, which always lower on the TPU VPU/EUP.
    a1, a2, a3, a4, a5 = (0.254829592, -0.284496736, 1.421413741,
                          -1.453152027, 1.061405429)
    p = 0.3275911
    sgn = jnp.where(y >= 0.0, 1.0, -1.0)
    ya = jnp.abs(y)
    t = 1.0 / (1.0 + p * ya)
    poly = ((((a5 * t + a4) * t + a3) * t + a2) * t + a1) * t
    return sgn * (1.0 - poly * jnp.exp(-ya * ya))


# --------------------------- single fused kernel -----------------------------
def fused_encoder_kernel(x_ref, g1_ref, be1_ref,
                         wqkv_ref, bqkv_ref,
                         wqkvh_ref, bqkvh_ref,
                         ert_ref,
                         wd_ref, bd_ref,
                         g2_ref, be2_ref,
                         w1_ref, bf1_ref, w2_ref, bf2_ref,
                         out1_ref, out2_ref,
                         *, batch, seq, num_heads, depth):
    bs = batch * seq                    # tokens
    nrows = num_heads * bs              # head-stacked rows
    d_model = num_heads * depth
    lg_bs, lg_dm, lg_seq = _ilog2(bs), _ilog2(d_model), _ilog2(seq)

    x = x_ref[...]                                              # (bs, D)
    xn = _layer_norm(x, g1_ref[...], be1_ref[...])

    # ---- packed Q|K|V projection (one MXU matmul; feeds the module outputs)
    qkv = (jnp.dot(xn, wqkv_ref[...], preferred_element_type=F32)
           + bqkv_ref[...])                                     # (bs, 3D)

    # ---- head-major Q/K/V for attention via block-diag lane expansion ------
    # xn_exp[h*bs + r, h*D + c] = xn[r, c]; a single matmul against the
    # host-side head-rearranged fused weight yields the (H*bs, 3*depth)
    # head stack with NO per-head lane slicing / sublane concatenation.
    xw = jnp.concatenate([xn] * num_heads, axis=1)              # (bs, H*D)
    xt = jnp.concatenate([xw] * num_heads, axis=0)              # (H*bs, H*D)
    rgrp = lax.broadcasted_iota(jnp.int32, xt.shape, 0) >> lg_bs
    cgrp = lax.broadcasted_iota(jnp.int32, xt.shape, 1) >> lg_dm
    xn_exp = jnp.where(rgrp == cgrp, xt, 0.0)
    qkvh = (jnp.dot(xn_exp, wqkvh_ref[...], preferred_element_type=F32)
            + bqkvh_ref[...])                                   # (H*bs, 3*depth)
    qh = qkvh[:, 0:depth]
    kh = qkvh[:, depth:2 * depth]
    vh = qkvh[:, 2 * depth:3 * depth]

    # ---- relative positions: QEr (one matmul) + the PyTorch "skew" ---------
    # Srel[i, j] = Aext[i, S-1 + j - i] with Aext row r = [QEr[r,:], 0,
    # QEr[r+1,:], 0-pad]; the r+1 wrap at the last row of each block is never
    # read.  Per-row rotation by i = row % S is a barrel rotate made of
    # full-lane pltpu.roll (XLU) steps + row-masked selects; wrapped lanes
    # never reach the read window [S-1, 2S-1).
    qer = jnp.dot(qh, ert_ref[...], preferred_element_type=F32)   # (H*bs, S)
    qer_next = pltpu.roll(qer, nrows - 1, 0)                      # row r -> r+1
    a = jnp.concatenate(
        [qer, jnp.zeros((nrows, 1), F32), qer_next,
         jnp.zeros((nrows, LANES - 2 * seq - 1), F32)], axis=1)   # (H*bs, 128)
    row_bits = lax.broadcasted_iota(jnp.int32, (nrows, 1), 0)
    amt = 1
    while amt < seq:                                              # static unroll
        rolled = pltpu.roll(a, amt, 1)
        a = jnp.where((row_bits & amt) != 0, rolled, a)
        amt *= 2
    srel = a[:, seq - 1:2 * seq - 1]                              # (H*bs, S)

    # ---- block-diagonal attention: 2 matmuls + 1 softmax -------------------
    logits = lax.dot_general(qh, kh, (((1,), (1,)), ((), ())),
                             preferred_element_type=F32)          # (H*bs, H*bs)
    srel_tiled = jnp.concatenate([srel] * (nrows // seq), axis=1)  # (H*bs, H*bs)
    logits = (logits + srel_tiled) * (1.0 / math.sqrt(depth))
    rblk = lax.broadcasted_iota(jnp.int32, logits.shape, 0) >> lg_seq
    cblk = lax.broadcasted_iota(jnp.int32, logits.shape, 1) >> lg_seq
    logits = jnp.where(rblk == cblk, logits, -1e30)   # mask off-(head,batch) blocks
    m = jnp.max(logits, axis=-1, keepdims=True)
    e = jnp.exp(logits - m)
    attn = e * pl.reciprocal(jnp.sum(e, axis=-1, keepdims=True), approx=True)
    out_all = jnp.dot(attn, vh, preferred_element_type=F32)       # (H*bs, depth)

    # ---- merge heads fused into the output projection ----------------------
    # dense[r] = sum_h out_all[h*bs + r] @ Wd[h*depth:(h+1)*depth]; every
    # slice is sublane-tile aligned (multiples of 8 rows) -> no lane copies.
    wd = wd_ref[...]                                              # (D, D)
    dense = jnp.zeros((bs, d_model), F32)
    for h in range(num_heads):
        dense = dense + jnp.dot(out_all[h * bs:(h + 1) * bs, :],
                                wd[h * depth:(h + 1) * depth, :],
                                preferred_element_type=F32)
    attn_output = dense + bd_ref[...] + x              # dropout == identity (eval)

    # ---- LN2 -> FFN (exact-erf GELU) -> residual ----------------------------
    h2 = _layer_norm(attn_output, g2_ref[...], be2_ref[...])
    ff1 = jnp.dot(h2, w1_ref[...], preferred_element_type=F32) + bf1_ref[...]
    gelu = 0.5 * ff1 * (1.0 + _erf(ff1 * (1.0 / math.sqrt(2.0))))
    ff2 = jnp.dot(gelu, w2_ref[...], preferred_element_type=F32) + bf2_ref[...]
    ff_out = ff2 + attn_output                         # dropout == identity (eval)

    # ---- lane-dense (128-wide) packed stores --------------------------------
    parts1 = [qkv, attn_output]                                   # (bs, 4D)
    if 4 * d_model < LANES:
        parts1.append(jnp.zeros((bs, LANES - 4 * d_model), F32))
    out1_ref[...] = jnp.concatenate(parts1, axis=1)               # [Q|K|V|attn]
    parts2 = [gelu, ff_out]
    pad2 = LANES - gelu.shape[1] - ff_out.shape[1]
    if pad2 > 0:
        parts2.append(jnp.zeros((bs, pad2), F32))
    out2_ref[...] = jnp.concatenate(parts2, axis=1)               # [gelu|ff|0]


# ------------------------------- wrapper -------------------------------------
def _prepare_inputs(x, params):
    """Host-side (plain JAX) activation flattening + parameter re-packing."""
    b, s, d = x.shape
    dep = d // H
    bs = b * s
    x2 = x.reshape(bs, d)

    wq_t, wk_t, wv_t = params["wq_t"], params["wk_t"], params["wv_t"]
    bq, bk, bv = params["bq"], params["bk"], params["bv"]

    # fused QKV weight/bias for the packed (bs, 3D) projection
    w_qkv = jnp.concatenate([wq_t, wk_t, wv_t], axis=1)            # (D, 3D)
    b_qkv = jnp.concatenate([bq, bk, bv], axis=1)                  # (1, 3D)

    # head-rearranged fused QKV weight for the head-major attention stack
    def head_w(w):                                                 # (D,D)->(H,D,dep)
        return w.reshape(d, H, dep).transpose(1, 0, 2)

    w_qkvh = jnp.concatenate(
        [head_w(wq_t), head_w(wk_t), head_w(wv_t)], axis=-1
    ).reshape(H * d, 3 * dep)                                      # (H*D, 3*dep)

    def head_b(bias):                                              # (1,D)->(H,bs,dep)
        return jnp.broadcast_to(bias.reshape(H, 1, dep), (H, bs, dep))

    b_qkvh = jnp.concatenate(
        [head_b(bq), head_b(bk), head_b(bv)], axis=-1
    ).reshape(H * bs, 3 * dep)                                     # (H*bs, 3*dep)

    er_t = params["er"][:s, :].T                                   # (dep, S)

    return (x2,
            params["ln1_g"], params["ln1_b"],
            w_qkv, b_qkv, w_qkvh, b_qkvh, er_t,
            params["wd_t"], params["bd"],
            params["ln2_g"], params["ln2_b"],
            params["w1_t"], params["b1"],
            params["w2_t"], params["b2"])


# TODO(synk): mask input is supported as None only (the PyTorch default);
# dropout is treated as identity (eval mode).
@jax.jit
def custom_encoder_block(x, params):
    """x: (B, S, D) float32.  Returns the same dict of tensors as the PyTorch
    module's forward (mask=None, dropout in eval mode)."""
    b, s, d = x.shape
    bs = b * s
    inputs = _prepare_inputs(x, params)

    kernel = functools.partial(fused_encoder_kernel, batch=b, seq=s,
                               num_heads=H, depth=d // H)
    out1, out2 = pl.pallas_call(
        kernel,
        out_shape=[
            jax.ShapeDtypeStruct((bs, LANES), F32),   # [ Q | K | V | attn_out ]
            jax.ShapeDtypeStruct((bs, LANES), F32),   # [ gelu | ff_out | pad ]
        ],
    )(*inputs)

    q = out1[:, 0:d]
    k = out1[:, d:2 * d]
    v = out1[:, 2 * d:3 * d]
    attn_out = out1[:, 3 * d:4 * d]
    gelu = out2[:, 0:FFN]
    ff = out2[:, FFN:FFN + d]
    return {
        "Q": q.reshape(b, s, d),
        "K": k.reshape(b, s, d),
        "V": v.reshape(b, s, d),
        "attention_output": attn_out.reshape(b, s, d),
        "intermediate_residual_stream": x,
        "feed_forward_output_gelu": gelu.reshape(b, s, FFN),
        "feed_forward_output": ff.reshape(b, s, d),
    }


# ---------------------- pure-JAX reference (for checking) --------------------
def reference_forward(x, params):
    def ln(v, g, bb):
        mu = v.mean(-1, keepdims=True)
        var = ((v - mu) ** 2).mean(-1, keepdims=True)
        return (v - mu) / jnp.sqrt(var + EPS) * g + bb

    xn = ln(x, params["ln1_g"], params["ln1_b"])
    q = xn @ params["wq_t"] + params["bq"]
    k = xn @ params["wk_t"] + params["bk"]
    v = xn @ params["wv_t"] + params["bv"]

    def split(t):
        return t.reshape(B, S, H, DEPTH).transpose(0, 2, 1, 3)

    qs, ks, vs = split(q), split(k), split(v)
    er = params["er"][:S]
    qer = jnp.einsum("bhsd,rd->bhsr", qs, er)
    zp = jnp.zeros((B, H, S, 1), F32)
    padded = jnp.concatenate([zp, qer], axis=-1)
    srel = padded.reshape(B, H, S + 1, S)[:, :, 1:, :]
    logits = (jnp.einsum("bhid,bhjd->bhij", qs, ks) + srel) / math.sqrt(DEPTH)
    attn = jax.nn.softmax(logits, axis=-1)
    out = jnp.einsum("bhij,bhjd->bhid", attn, vs)
    merged = out.transpose(0, 2, 1, 3).reshape(B, S, D)
    dense = merged @ params["wd_t"] + params["bd"]
    attn_output = dense + x
    h2 = ln(attn_output, params["ln2_g"], params["ln2_b"])
    ff1 = h2 @ params["w1_t"] + params["b1"]
    gelu = 0.5 * ff1 * (1.0 + jax.lax.erf(ff1 / math.sqrt(2.0)))
    ff2 = gelu @ params["w2_t"] + params["b2"]
    return {
        "Q": q, "K": k, "V": v,
        "attention_output": attn_output,
        "intermediate_residual_stream": x,
        "feed_forward_output_gelu": gelu,
        "feed_forward_output": ff2 + attn_output,
    }


# --------------------------- deterministic init ------------------------------
def init_params(key):
    ks = jax.random.split(key, 16)

    def linear(kw, kb, fan_in, fan_out):
        bound = 1.0 / math.sqrt(fan_in)
        w_t = jax.random.uniform(kw, (fan_in, fan_out), F32, -bound, bound)
        b = jax.random.uniform(kb, (1, fan_out), F32, -bound, bound)
        return w_t, b

    wq_t, bq = linear(ks[0], ks[1], D, D)
    wk_t, bk = linear(ks[2], ks[3], D, D)
    wv_t, bv = linear(ks[4], ks[5], D, D)
    wd_t, bd = linear(ks[6], ks[7], D, D)
    w1_t, b1 = linear(ks[8], ks[9], D, FFN)
    w2_t, b2 = linear(ks[10], ks[11], FFN, D)
    er = jax.random.normal(ks[12], (MAX_LEN, DEPTH), F32)    # torch.randn
    ln1_g = 1.0 + 0.1 * jax.random.normal(ks[13], (1, D), F32)
    ln1_b = 0.1 * jax.random.normal(ks[14], (1, D), F32)
    ln2_g = 1.0 + 0.1 * jax.random.normal(ks[15], (1, D), F32)
    ln2_b = jnp.zeros((1, D), F32)

    return dict(
        wq_t=wq_t, bq=bq, wk_t=wk_t, bk=bk, wv_t=wv_t, bv=bv,
        wd_t=wd_t, bd=bd, w1_t=w1_t, b1=b1, w2_t=w2_t, b2=b2,
        er=er, ln1_g=ln1_g, ln1_b=ln1_b, ln2_g=ln2_g, ln2_b=ln2_b,
    )


if __name__ == "__main__":
    key = jax.random.PRNGKey(0)
    k_x, k_p = jax.random.split(key)
    x = jax.random.normal(k_x, (B, S, D), F32)
    params = init_params(k_p)

    out = custom_encoder_block(x, params)
    jax.block_until_ready(out)

    # shape sanity
    assert out["Q"].shape == (B, S, D)
    assert out["K"].shape == (B, S, D)
    assert out["V"].shape == (B, S, D)
    assert out["attention_output"].shape == (B, S, D)
    assert out["feed_forward_output_gelu"].shape == (B, S, FFN)
    assert out["feed_forward_output"].shape == (B, S, D)

    # numerical check vs. a pure-JAX replica of the PyTorch forward
    with jax.default_matmul_precision("highest"):
        ref = reference_forward(x, params)
    for name in ("Q", "K", "V", "attention_output",
                 "feed_forward_output_gelu", "feed_forward_output"):
        err = float(jnp.max(jnp.abs(out[name] - ref[name])))
        assert err < 2e-2, f"{name} mismatch: max abs err {err}"

    print("KERNEL_OK")
</pallas_src>

<mosaic_0001>
module attributes {stable_mosaic.version = 11 : i64} {
  func.func @fused_encoder_kernel(%arg0: memref<16x32xf32, #tpu.memory_space<vmem>>, %arg1: memref<1x32xf32, #tpu.memory_space<vmem>>, %arg2: memref<1x32xf32, #tpu.memory_space<vmem>>, %arg3: memref<32x96xf32, #tpu.memory_space<vmem>>, %arg4: memref<1x96xf32, #tpu.memory_space<vmem>>, %arg5: memref<128x24xf32, #tpu.memory_space<vmem>>, %arg6: memref<64x24xf32, #tpu.memory_space<vmem>>, %arg7: memref<8x8xf32, #tpu.memory_space<vmem>>, %arg8: memref<32x32xf32, #tpu.memory_space<vmem>>, %arg9: memref<1x32xf32, #tpu.memory_space<vmem>>, %arg10: memref<1x32xf32, #tpu.memory_space<vmem>>, %arg11: memref<1x32xf32, #tpu.memory_space<vmem>>, %arg12: memref<32x64xf32, #tpu.memory_space<vmem>>, %arg13: memref<1x64xf32, #tpu.memory_space<vmem>>, %arg14: memref<64x32xf32, #tpu.memory_space<vmem>>, %arg15: memref<1x32xf32, #tpu.memory_space<vmem>>, %arg16: memref<16x128xf32, #tpu.memory_space<vmem>>, %arg17: memref<16x128xf32, #tpu.memory_space<vmem>>) attributes {dimension_semantics = [], scalar_prefetch = 0 : i64, scratch_operands = 0 : i64, tpu.core_type = #tpu.core_type<tc>} {
    %c0 = arith.constant 0 : index
    %c0_0 = arith.constant 0 : index
    %0 = vector.load %arg0[%c0, %c0_0] : memref<16x32xf32, #tpu.memory_space<vmem>>, vector<16x32xf32>
    %c0_1 = arith.constant 0 : index
    %c0_2 = arith.constant 0 : index
    %1 = vector.load %arg1[%c0_1, %c0_2] : memref<1x32xf32, #tpu.memory_space<vmem>>, vector<1x32xf32>
    %c0_3 = arith.constant 0 : index
    %c0_4 = arith.constant 0 : index
    %2 = vector.load %arg2[%c0_3, %c0_4] : memref<1x32xf32, #tpu.memory_space<vmem>>, vector<1x32xf32>
    %cst = arith.constant dense<0.000000e+00> : vector<16xf32>
    %3 = vector.multi_reduction <add>, %0, %cst [1] : vector<16x32xf32> to vector<16xf32>
    %4 = vector.shape_cast %3 : vector<16xf32> to vector<16x1xf32>
    %cst_5 = arith.constant 3.200000e+01 : f32
    %5 = vector.broadcast %cst_5 : f32 to vector<16x1xf32>
    %6 = arith.divf %4, %5 : vector<16x1xf32>
    %7 = vector.broadcast %6 : vector<16x1xf32> to vector<16x32xf32>
    %8 = arith.subf %0, %7 : vector<16x32xf32>
    %9 = arith.mulf %8, %8 : vector<16x32xf32>
    %cst_6 = arith.constant dense<0.000000e+00> : vector<16xf32>
    %10 = vector.multi_reduction <add>, %9, %cst_6 [1] : vector<16x32xf32> to vector<16xf32>
    %11 = vector.shape_cast %10 : vector<16xf32> to vector<16x1xf32>
    %cst_7 = arith.constant 3.200000e+01 : f32
    %12 = vector.broadcast %cst_7 : f32 to vector<16x1xf32>
    %13 = arith.divf %11, %12 : vector<16x1xf32>
    %14 = vector.broadcast %6 : vector<16x1xf32> to vector<16x32xf32>
    %15 = arith.subf %0, %14 : vector<16x32xf32>
    %cst_8 = arith.constant 9.99999974E-6 : f32
    %16 = vector.broadcast %cst_8 : f32 to vector<16x1xf32>
    %17 = arith.addf %13, %16 : vector<16x1xf32>
    %18 = math.rsqrt %17 : vector<16x1xf32>
    %19 = vector.broadcast %18 : vector<16x1xf32> to vector<16x32xf32>
    %20 = arith.mulf %15, %19 : vector<16x32xf32>
    %21 = vector.broadcast %1 : vector<1x32xf32> to vector<16x32xf32>
    %22 = arith.mulf %20, %21 : vector<16x32xf32>
    %23 = vector.broadcast %2 : vector<1x32xf32> to vector<16x32xf32>
    %24 = arith.addf %22, %23 : vector<16x32xf32>
    %c0_9 = arith.constant 0 : index
    %c0_10 = arith.constant 0 : index
    %25 = vector.load %arg3[%c0_9, %c0_10] : memref<32x96xf32, #tpu.memory_space<vmem>>, vector<32x96xf32>
    %cst_11 = arith.constant dense<0.000000e+00> : vector<16x96xf32>
    %26 = tpu.matmul %24, %25, %cst_11 {dimension_numbers = #tpu.dot_dimension_numbers<[1], [0], [0], [1], [0, 0, 1, 1], [], []>} : vector<16x32xf32>, vector<32x96xf32>, vector<16x96xf32> -> vector<16x96xf32>
    %c0_12 = arith.constant 0 : index
    %c0_13 = arith.constant 0 : index
    %27 = vector.load %arg4[%c0_12, %c0_13] : memref<1x96xf32, #tpu.memory_space<vmem>>, vector<1x96xf32>
    %28 = vector.broadcast %27 : vector<1x96xf32> to vector<16x96xf32>
    %29 = arith.addf %26, %28 : vector<16x96xf32>
    %30 = tpu.concatenate %24, %24, %24, %24 in 1 : vector<16x32xf32>, vector<16x32xf32>, vector<16x32xf32>, vector<16x32xf32> -> vector<16x128xf32>
    %31 = tpu.concatenate %30, %30, %30, %30 in 0 : vector<16x128xf32>, vector<16x128xf32>, vector<16x128xf32>, vector<16x128xf32> -> vector<64x128xf32>
    %32 = tpu.iota {dimensions = array<i32: 0>} : vector<64x128xi32>
    %c4_i32 = arith.constant 4 : i32
    %33 = vector.broadcast %c4_i32 : i32 to vector<64x128xi32>
    %34 = arith.shrsi %32, %33 : vector<64x128xi32>
    %35 = tpu.iota {dimensions = array<i32: 1>} : vector<64x128xi32>
    %c5_i32 = arith.constant 5 : i32
    %36 = vector.broadcast %c5_i32 : i32 to vector<64x128xi32>
    %37 = arith.shrsi %35, %36 : vector<64x128xi32>
    %38 = arith.cmpi eq, %34, %37 : vector<64x128xi32>
    %cst_14 = arith.constant 0.000000e+00 : f32
    %39 = vector.broadcast %cst_14 : f32 to vector<64x128xf32>
    %40 = arith.select %38, %31, %39 : vector<64x128xi1>, vector<64x128xf32>
    %c0_15 = arith.constant 0 : index
    %c0_16 = arith.constant 0 : index
    %41 = vector.load %arg5[%c0_15, %c0_16] : memref<128x24xf32, #tpu.memory_space<vmem>>, vector<128x24xf32>
    %cst_17 = arith.constant dense<0.000000e+00> : vector<64x24xf32>
    %42 = tpu.matmul %40, %41, %cst_17 {dimension_numbers = #tpu.dot_dimension_numbers<[1], [0], [0], [1], [0, 0, 1, 1], [], []>} : vector<64x128xf32>, vector<128x24xf32>, vector<64x24xf32> -> vector<64x24xf32>
    %c0_18 = arith.constant 0 : index
    %c0_19 = arith.constant 0 : index
    %43 = vector.load %arg6[%c0_18, %c0_19] : memref<64x24xf32, #tpu.memory_space<vmem>>, vector<64x24xf32>
    %44 = arith.addf %42, %43 : vector<64x24xf32>
    %45 = vector.extract_strided_slice %44 {offsets = [0, 0], sizes = [64, 8], strides = [1, 1]} : vector<64x24xf32> to vector<64x8xf32>
    %46 = vector.extract_strided_slice %44 {offsets = [0, 8], sizes = [64, 8], strides = [1, 1]} : vector<64x24xf32> to vector<64x8xf32>
    %47 = vector.extract_strided_slice %44 {offsets = [0, 16], sizes = [64, 8], strides = [1, 1]} : vector<64x24xf32> to vector<64x8xf32>
    %c0_20 = arith.constant 0 : index
    %c0_21 = arith.constant 0 : index
    %48 = vector.load %arg7[%c0_20, %c0_21] : memref<8x8xf32, #tpu.memory_space<vmem>>, vector<8x8xf32>
    %cst_22 = arith.constant dense<0.000000e+00> : vector<64x8xf32>
    %49 = tpu.matmul %45, %48, %cst_22 {dimension_numbers = #tpu.dot_dimension_numbers<[1], [0], [0], [1], [0, 0, 1, 1], [], []>} : vector<64x8xf32>, vector<8x8xf32>, vector<64x8xf32> -> vector<64x8xf32>
    %c63_i32 = arith.constant 63 : i32
    %50 = tpu.dynamic_rotate %49 by %c63_i32 dim 0 : vector<64x8xf32>, i32 -> vector<64x8xf32>
    %cst_23 = arith.constant 0.000000e+00 : f32
    %51 = vector.broadcast %cst_23 : f32 to vector<64x1xf32>
    %cst_24 = arith.constant 0.000000e+00 : f32
    %52 = vector.broadcast %cst_24 : f32 to vector<64x111xf32>
    %53 = tpu.concatenate %49, %51, %50, %52 in 1 : vector<64x8xf32>, vector<64x1xf32>, vector<64x8xf32>, vector<64x111xf32> -> vector<64x128xf32>
    %54 = tpu.iota {dimensions = array<i32: 0>} : vector<64x1xi32>
    %c1_i32 = arith.constant 1 : i32
    %55 = tpu.dynamic_rotate %53 by %c1_i32 dim 1 : vector<64x128xf32>, i32 -> vector<64x128xf32>
    %c1_i32_25 = arith.constant 1 : i32
    %56 = vector.broadcast %c1_i32_25 : i32 to vector<64x1xi32>
    %57 = arith.andi %54, %56 : vector<64x1xi32>
    %c0_i32 = arith.constant 0 : i32
    %58 = vector.broadcast %c0_i32 : i32 to vector<64x1xi32>
    %59 = arith.cmpi ne, %57, %58 : vector<64x1xi32>
    %60 = vector.shape_cast %59 : vector<64x1xi1> to vector<64x1xi1>
    %61 = vector.broadcast %60 : vector<64x1xi1> to vector<64x128xi1>
    %62 = arith.select %61, %55, %53 : vector<64x128xi1>, vector<64x128xf32>
    %c2_i32 = arith.constant 2 : i32
    %63 = tpu.dynamic_rotate %62 by %c2_i32 dim 1 : vector<64x128xf32>, i32 -> vector<64x128xf32>
    %c2_i32_26 = arith.constant 2 : i32
    %64 = vector.broadcast %c2_i32_26 : i32 to vector<64x1xi32>
    %65 = arith.andi %54, %64 : vector<64x1xi32>
    %c0_i32_27 = arith.constant 0 : i32
    %66 = vector.broadcast %c0_i32_27 : i32 to vector<64x1xi32>
    %67 = arith.cmpi ne, %65, %66 : vector<64x1xi32>
    %68 = vector.shape_cast %67 : vector<64x1xi1> to vector<64x1xi1>
    %69 = vector.broadcast %68 : vector<64x1xi1> to vector<64x128xi1>
    %70 = arith.select %69, %63, %62 : vector<64x128xi1>, vector<64x128xf32>
    %c4_i32_28 = arith.constant 4 : i32
    %71 = tpu.dynamic_rotate %70 by %c4_i32_28 dim 1 : vector<64x128xf32>, i32 -> vector<64x128xf32>
    %c4_i32_29 = arith.constant 4 : i32
    %72 = vector.broadcast %c4_i32_29 : i32 to vector<64x1xi32>
    %73 = arith.andi %54, %72 : vector<64x1xi32>
    %c0_i32_30 = arith.constant 0 : i32
    %74 = vector.broadcast %c0_i32_30 : i32 to vector<64x1xi32>
    %75 = arith.cmpi ne, %73, %74 : vector<64x1xi32>
    %76 = vector.shape_cast %75 : vector<64x1xi1> to vector<64x1xi1>
    %77 = vector.broadcast %76 : vector<64x1xi1> to vector<64x128xi1>
    %78 = arith.select %77, %71, %70 : vector<64x128xi1>, vector<64x128xf32>
    %79 = vector.extract_strided_slice %78 {offsets = [0, 7], sizes = [64, 8], strides = [1, 1]} : vector<64x128xf32> to vector<64x8xf32>
    %cst_31 = arith.constant dense<0.000000e+00> : vector<64x64xf32>
    %80 = tpu.matmul %45, %46, %cst_31 {dimension_numbers = #tpu.dot_dimension_numbers<[1], [1], [0], [0], [0, 0, 1, 0], [], []>} : vector<64x8xf32>, vector<64x8xf32>, vector<64x64xf32> -> vector<64x64xf32>
    %81 = tpu.concatenate %79, %79, %79, %79, %79, %79, %79, %79 in 1 : vector<64x8xf32>, vector<64x8xf32>, vector<64x8xf32>, vector<64x8xf32>, vector<64x8xf32>, vector<64x8xf32>, vector<64x8xf32>, vector<64x8xf32> -> vector<64x64xf32>
    %82 = arith.addf %80, %81 : vector<64x64xf32>
    %cst_32 = arith.constant 0.353553385 : f32
    %83 = vector.broadcast %cst_32 : f32 to vector<64x64xf32>
    %84 = arith.mulf %82, %83 : vector<64x64xf32>
    %85 = tpu.iota {dimensions = array<i32: 0>} : vector<64x64xi32>
    %c3_i32 = arith.constant 3 : i32
    %86 = vector.broadcast %c3_i32 : i32 to vector<64x64xi32>
    %87 = arith.shrsi %85, %86 : vector<64x64xi32>
    %88 = tpu.iota {dimensions = array<i32: 1>} : vector<64x64xi32>
    %c3_i32_33 = arith.constant 3 : i32
    %89 = vector.broadcast %c3_i32_33 : i32 to vector<64x64xi32>
    %90 = arith.shrsi %88, %89 : vector<64x64xi32>
    %91 = arith.cmpi eq, %87, %90 : vector<64x64xi32>
    %cst_34 = arith.constant -1.000000e+30 : f32
    %92 = vector.broadcast %cst_34 : f32 to vector<64x64xf32>
    %93 = arith.select %91, %84, %92 : vector<64x64xi1>, vector<64x64xf32>
    %cst_35 = arith.constant dense<0xFF800000> : vector<64xf32>
    %94 = vector.multi_reduction <maximumf>, %93, %cst_35 [1] : vector<64x64xf32> to vector<64xf32>
    %95 = vector.shape_cast %94 : vector<64xf32> to vector<64x1xf32>
    %96 = vector.broadcast %95 : vector<64x1xf32> to vector<64x64xf32>
    %97 = arith.subf %93, %96 : vector<64x64xf32>
    %98 = math.exp %97 : vector<64x64xf32>
    %cst_36 = arith.constant dense<0.000000e+00> : vector<64xf32>
    %99 = vector.multi_reduction <add>, %98, %cst_36 [1] : vector<64x64xf32> to vector<64xf32>
    %100 = vector.shape_cast %99 : vector<64xf32> to vector<64x1xf32>
    %101 = tpu.reciprocal %100 {approx = true} : vector<64x1xf32> -> vector<64x1xf32>
    %102 = vector.broadcast %101 : vector<64x1xf32> to vector<64x64xf32>
    %103 = arith.mulf %98, %102 : vector<64x64xf32>
    %cst_37 = arith.constant dense<0.000000e+00> : vector<64x8xf32>
    %104 = tpu.matmul %103, %47, %cst_37 {dimension_numbers = #tpu.dot_dimension_numbers<[1], [0], [0], [1], [0, 0, 1, 1], [], []>} : vector<64x64xf32>, vector<64x8xf32>, vector<64x8xf32> -> vector<64x8xf32>
    %c0_38 = arith.constant 0 : index
    %c0_39 = arith.constant 0 : index
    %105 = vector.load %arg8[%c0_38, %c0_39] : memref<32x32xf32, #tpu.memory_space<vmem>>, vector<32x32xf32>
    %cst_40 = arith.constant 0.000000e+00 : f32
    %106 = vector.broadcast %cst_40 : f32 to vector<16x32xf32>
    %107 = vector.extract_strided_slice %104 {offsets = [0, 0], sizes = [16, 8], strides = [1, 1]} : vector<64x8xf32> to vector<16x8xf32>
    %108 = vector.extract_strided_slice %105 {offsets = [0, 0], sizes = [8, 32], strides = [1, 1]} : vector<32x32xf32> to vector<8x32xf32>
    %cst_41 = arith.constant dense<0.000000e+00> : vector<16x32xf32>
    %109 = tpu.matmul %107, %108, %cst_41 {dimension_numbers = #tpu.dot_dimension_numbers<[1], [0], [0], [1], [0, 0, 1, 1], [], []>} : vector<16x8xf32>, vector<8x32xf32>, vector<16x32xf32> -> vector<16x32xf32>
    %110 = arith.addf %106, %109 : vector<16x32xf32>
    %111 = vector.extract_strided_slice %104 {offsets = [16, 0], sizes = [16, 8], strides = [1, 1]} : vector<64x8xf32> to vector<16x8xf32>
    %112 = vector.extract_strided_slice %105 {offsets = [8, 0], sizes = [8, 32], strides = [1, 1]} : vector<32x32xf32> to vector<8x32xf32>
    %cst_42 = arith.constant dense<0.000000e+00> : vector<16x32xf32>
    %113 = tpu.matmul %111, %112, %cst_42 {dimension_numbers = #tpu.dot_dimension_numbers<[1], [0], [0], [1], [0, 0, 1, 1], [], []>} : vector<16x8xf32>, vector<8x32xf32>, vector<16x32xf32> -> vector<16x32xf32>
    %114 = arith.addf %110, %113 : vector<16x32xf32>
    %115 = vector.extract_strided_slice %104 {offsets = [32, 0], sizes = [16, 8], strides = [1, 1]} : vector<64x8xf32> to vector<16x8xf32>
    %116 = vector.extract_strided_slice %105 {offsets = [16, 0], sizes = [8, 32], strides = [1, 1]} : vector<32x32xf32> to vector<8x32xf32>
    %cst_43 = arith.constant dense<0.000000e+00> : vector<16x32xf32>
    %117 = tpu.matmul %115, %116, %cst_43 {dimension_numbers = #tpu.dot_dimension_numbers<[1], [0], [0], [1], [0, 0, 1, 1], [], []>} : vector<16x8xf32>, vector<8x32xf32>, vector<16x32xf32> -> vector<16x32xf32>
    %118 = arith.addf %114, %117 : vector<16x32xf32>
    %119 = vector.extract_strided_slice %104 {offsets = [48, 0], sizes = [16, 8], strides = [1, 1]} : vector<64x8xf32> to vector<16x8xf32>
    %120 = vector.extract_strided_slice %105 {offsets = [24, 0], sizes = [8, 32], strides = [1, 1]} : vector<32x32xf32> to vector<8x32xf32>
    %cst_44 = arith.constant dense<0.000000e+00> : vector<16x32xf32>
    %121 = tpu.matmul %119, %120, %cst_44 {dimension_numbers = #tpu.dot_dimension_numbers<[1], [0], [0], [1], [0, 0, 1, 1], [], []>} : vector<16x8xf32>, vector<8x32xf32>, vector<16x32xf32> -> vector<16x32xf32>
    %122 = arith.addf %118, %121 : vector<16x32xf32>
    %c0_45 = arith.constant 0 : index
    %c0_46 = arith.constant 0 : index
    %123 = vector.load %arg9[%c0_45, %c0_46] : memref<1x32xf32, #tpu.memory_space<vmem>>, vector<1x32xf32>
    %124 = vector.broadcast %123 : vector<1x32xf32> to vector<16x32xf32>
    %125 = arith.addf %122, %124 : vector<16x32xf32>
    %126 = arith.addf %125, %0 : vector<16x32xf32>
    %c0_47 = arith.constant 0 : index
    %c0_48 = arith.constant 0 : index
    %127 = vector.load %arg10[%c0_47, %c0_48] : memref<1x32xf32, #tpu.memory_space<vmem>>, vector<1x32xf32>
    %c0_49 = arith.constant 0 : index
    %c0_50 = arith.constant 0 : index
    %128 = vector.load %arg11[%c0_49, %c0_50] : memref<1x32xf32, #tpu.memory_space<vmem>>, vector<1x32xf32>
    %cst_51 = arith.constant dense<0.000000e+00> : vector<16xf32>
    %129 = vector.multi_reduction <add>, %126, %cst_51 [1] : vector<16x32xf32> to vector<16xf32>
    %130 = vector.shape_cast %129 : vector<16xf32> to vector<16x1xf32>
    %cst_52 = arith.constant 3.200000e+01 : f32
    %131 = vector.broadcast %cst_52 : f32 to vector<16x1xf32>
    %132 = arith.divf %130, %131 : vector<16x1xf32>
    %133 = vector.broadcast %132 : vector<16x1xf32> to vector<16x32xf32>
    %134 = arith.subf %126, %133 : vector<16x32xf32>
    %135 = arith.mulf %134, %134 : vector<16x32xf32>
    %cst_53 = arith.constant dense<0.000000e+00> : vector<16xf32>
    %136 = vector.multi_reduction <add>, %135, %cst_53 [1] : vector<16x32xf32> to vector<16xf32>
    %137 = vector.shape_cast %136 : vector<16xf32> to vector<16x1xf32>
    %cst_54 = arith.constant 3.200000e+01 : f32
    %138 = vector.broadcast %cst_54 : f32 to vector<16x1xf32>
    %139 = arith.divf %137, %138 : vector<16x1xf32>
    %140 = vector.broadcast %132 : vector<16x1xf32> to vector<16x32xf32>
    %141 = arith.subf %126, %140 : vector<16x32xf32>
    %cst_55 = arith.constant 9.99999974E-6 : f32
    %142 = vector.broadcast %cst_55 : f32 to vector<16x1xf32>
    %143 = arith.addf %139, %142 : vector<16x1xf32>
    %144 = math.rsqrt %143 : vector<16x1xf32>
    %145 = vector.broadcast %144 : vector<16x1xf32> to vector<16x32xf32>
    %146 = arith.mulf %141, %145 : vector<16x32xf32>
    %147 = vector.broadcast %127 : vector<1x32xf32> to vector<16x32xf32>
    %148 = arith.mulf %146, %147 : vector<16x32xf32>
    %149 = vector.broadcast %128 : vector<1x32xf32> to vector<16x32xf32>
    %150 = arith.addf %148, %149 : vector<16x32xf32>
    %c0_56 = arith.constant 0 : index
    %c0_57 = arith.constant 0 : index
    %151 = vector.load %arg12[%c0_56, %c0_57] : memref<32x64xf32, #tpu.memory_space<vmem>>, vector<32x64xf32>
    %cst_58 = arith.constant dense<0.000000e+00> : vector<16x64xf32>
    %152 = tpu.matmul %150, %151, %cst_58 {dimension_numbers = #tpu.dot_dimension_numbers<[1], [0], [0], [1], [0, 0, 1, 1], [], []>} : vector<16x32xf32>, vector<32x64xf32>, vector<16x64xf32> -> vector<16x64xf32>
    %c0_59 = arith.constant 0 : index
    %c0_60 = arith.constant 0 : index
    %153 = vector.load %arg13[%c0_59, %c0_60] : memref<1x64xf32, #tpu.memory_space<vmem>>, vector<1x64xf32>
    %154 = vector.broadcast %153 : vector<1x64xf32> to vector<16x64xf32>
    %155 = arith.addf %152, %154 : vector<16x64xf32>
    %cst_61 = arith.constant 5.000000e-01 : f32
    %156 = vector.broadcast %cst_61 : f32 to vector<16x64xf32>
    %157 = arith.mulf %156, %155 : vector<16x64xf32>
    %cst_62 = arith.constant 0.707106769 : f32
    %158 = vector.broadcast %cst_62 : f32 to vector<16x64xf32>
    %159 = arith.mulf %155, %158 : vector<16x64xf32>
    %cst_63 = arith.constant 0.000000e+00 : f32
    %160 = vector.broadcast %cst_63 : f32 to vector<16x64xf32>
    %161 = arith.cmpf oge, %159, %160 : vector<16x64xf32>
    %cst_64 = arith.constant 1.000000e+00 : f32
    %cst_65 = arith.constant -1.000000e+00 : f32
    %162 = vector.broadcast %cst_64 : f32 to vector<16x64xf32>
    %163 = vector.broadcast %cst_65 : f32 to vector<16x64xf32>
    %164 = arith.select %161, %162, %163 : vector<16x64xi1>, vector<16x64xf32>
    %165 = math.absf %159 : vector<16x64xf32>
    %cst_66 = arith.constant 0.327591091 : f32
    %166 = vector.broadcast %cst_66 : f32 to vector<16x64xf32>
    %167 = arith.mulf %166, %165 : vector<16x64xf32>
    %cst_67 = arith.constant 1.000000e+00 : f32
    %168 = vector.broadcast %cst_67 : f32 to vector<16x64xf32>
    %169 = arith.addf %168, %167 : vector<16x64xf32>
    %cst_68 = arith.constant 1.000000e+00 : f32
    %170 = vector.broadcast %cst_68 : f32 to vector<16x64xf32>
    %171 = arith.divf %170, %169 : vector<16x64xf32>
    %cst_69 = arith.constant 1.06140542 : f32
    %172 = vector.broadcast %cst_69 : f32 to vector<16x64xf32>
    %173 = arith.mulf %172, %171 : vector<16x64xf32>
    %cst_70 = arith.constant -1.45315206 : f32
    %174 = vector.broadcast %cst_70 : f32 to vector<16x64xf32>
    %175 = arith.addf %173, %174 : vector<16x64xf32>
    %176 = arith.mulf %175, %171 : vector<16x64xf32>
    %cst_71 = arith.constant 1.42141378 : f32
    %177 = vector.broadcast %cst_71 : f32 to vector<16x64xf32>
    %178 = arith.addf %176, %177 : vector<16x64xf32>
    %179 = arith.mulf %178, %171 : vector<16x64xf32>
    %cst_72 = arith.constant -0.284496725 : f32
    %180 = vector.broadcast %cst_72 : f32 to vector<16x64xf32>
    %181 = arith.addf %179, %180 : vector<16x64xf32>
    %182 = arith.mulf %181, %171 : vector<16x64xf32>
    %cst_73 = arith.constant 0.254829586 : f32
    %183 = vector.broadcast %cst_73 : f32 to vector<16x64xf32>
    %184 = arith.addf %182, %183 : vector<16x64xf32>
    %185 = arith.mulf %184, %171 : vector<16x64xf32>
    %cst_74 = arith.constant 0.000000e+00 : f32
    %186 = vector.broadcast %cst_74 : f32 to vector<16x64xf32>
    %187 = arith.subf %186, %165 : vector<16x64xf32>
    %188 = arith.mulf %187, %165 : vector<16x64xf32>
    %189 = math.exp %188 : vector<16x64xf32>
    %190 = arith.mulf %185, %189 : vector<16x64xf32>
    %cst_75 = arith.constant 1.000000e+00 : f32
    %191 = vector.broadcast %cst_75 : f32 to vector<16x64xf32>
    %192 = arith.subf %191, %190 : vector<16x64xf32>
    %193 = arith.mulf %164, %192 : vector<16x64xf32>
    %cst_76 = arith.constant 1.000000e+00 : f32
    %194 = vector.broadcast %cst_76 : f32 to vector<16x64xf32>
    %195 = arith.addf %194, %193 : vector<16x64xf32>
    %196 = arith.mulf %157, %195 : vector<16x64xf32>
    %c0_77 = arith.constant 0 : index
    %c0_78 = arith.constant 0 : index
    %197 = vector.load %arg14[%c0_77, %c0_78] : memref<64x32xf32, #tpu.memory_space<vmem>>, vector<64x32xf32>
    %cst_79 = arith.constant dense<0.000000e+00> : vector<16x32xf32>
    %198 = tpu.matmul %196, %197, %cst_79 {dimension_numbers = #tpu.dot_dimension_numbers<[1], [0], [0], [1], [0, 0, 1, 1], [], []>} : vector<16x64xf32>, vector<64x32xf32>, vector<16x32xf32> -> vector<16x32xf32>
    %c0_80 = arith.constant 0 : index
    %c0_81 = arith.constant 0 : index
    %199 = vector.load %arg15[%c0_80, %c0_81] : memref<1x32xf32, #tpu.memory_space<vmem>>, vector<1x32xf32>
    %200 = vector.broadcast %199 : vector<1x32xf32> to vector<16x32xf32>
    %201 = arith.addf %198, %200 : vector<16x32xf32>
    %202 = arith.addf %201, %126 : vector<16x32xf32>
    %203 = tpu.concatenate %29, %126 in 1 : vector<16x96xf32>, vector<16x32xf32> -> vector<16x128xf32>
    %c0_82 = arith.constant 0 : index
    %c0_83 = arith.constant 0 : index
    %204 = vector.load %arg16[%c0_82, %c0_83] : memref<16x128xf32, #tpu.memory_space<vmem>>, vector<16x128xf32>
    tpu.vector_store %arg16[%c0_82, %c0_83], %203 {strides = array<i32>} : memref<16x128xf32, #tpu.memory_space<vmem>>, vector<16x128xf32>,
    %cst_84 = arith.constant 0.000000e+00 : f32
    %205 = vector.broadcast %cst_84 : f32 to vector<16x32xf32>
    %206 = tpu.concatenate %196, %202, %205 in 1 : vector<16x64xf32>, vector<16x32xf32>, vector<16x32xf32> -> vector<16x128xf32>
    %c0_85 = arith.constant 0 : index
    %c0_86 = arith.constant 0 : index
    %207 = vector.load %arg17[%c0_85, %c0_86] : memref<16x128xf32, #tpu.memory_space<vmem>>, vector<16x128xf32>
    tpu.vector_store %arg17[%c0_85, %c0_86], %206 {strides = array<i32>} : memref<16x128xf32, #tpu.memory_space<vmem>>, vector<16x128xf32>,
    return
  }
}

</mosaic_0001>

<llo_original>
// kernel: custom_encoder_block.1
$region0: #{custom_encoder_block.1}
  #allocation0 [shape = 'u32[]', space=smem, size = 0x4, offset = 0x4, fixed_abs, tag = 'smem constant byte address 0x4 - core index']
  #allocation1 [shape = 'u32[72,128]{1,0:T(1,128)}', space=vmem, size = 0x9000, scoped, tag = 'internal scratch']
  %s0 = inlined_call_operand.vmem [shape: f32[16,32], index: 0, kind: input, shape index: {}]
  %s1 = inlined_call_operand.vmem [shape: f32[1,32], index: 1, kind: input, shape index: {}]
  %s2 = inlined_call_operand.vmem [shape: f32[1,32], index: 2, kind: input, shape index: {}]
  %s3 = inlined_call_operand.vmem [shape: f32[32,96], index: 3, kind: input, shape index: {}]
  %s4 = inlined_call_operand.vmem [shape: f32[1,96], index: 4, kind: input, shape index: {}]
  %s5 = inlined_call_operand.vmem [shape: f32[128,24], index: 5, kind: input, shape index: {}]
  %s6 = inlined_call_operand.vmem [shape: f32[64,24], index: 6, kind: input, shape index: {}]
  %s7 = inlined_call_operand.vmem [shape: f32[8,8], index: 7, kind: input, shape index: {}]
  %s8 = inlined_call_operand.vmem [shape: f32[32,32], index: 8, kind: input, shape index: {}]
  %s9 = inlined_call_operand.vmem [shape: f32[1,32], index: 9, kind: input, shape index: {}]
  %s10 = inlined_call_operand.vmem [shape: f32[1,32], index: 10, kind: input, shape index: {}]
  %s11 = inlined_call_operand.vmem [shape: f32[1,32], index: 11, kind: input, shape index: {}]
  %s12 = inlined_call_operand.vmem [shape: f32[32,64], index: 12, kind: input, shape index: {}]
  %s13 = inlined_call_operand.vmem [shape: f32[1,64], index: 13, kind: input, shape index: {}]
  %s14 = inlined_call_operand.vmem [shape: f32[64,32], index: 14, kind: input, shape index: {}]
  %s15 = inlined_call_operand.vmem [shape: f32[1,32], index: 15, kind: input, shape index: {}]
  %s16 = inlined_call_operand.vmem [shape: f32[16,128], index: 16, kind: output, shape index: {0}]
  %s17 = inlined_call_operand.vmem [shape: f32[16,128], index: 17, kind: output, shape index: {1}]
  %18 = xla_tuple %s16, %s17
  %s19 = sld [smem:[#allocation0]]
  $region82: #{custom_encoder_block.1} parent=0
    _
  %s21 = ssub.s32 1, %s19
  %s22 = scalar_select 0, %s21, %s19
  // Predicated region
  $region2: #{custom_encoder_block.1} parent=0 // pred_check
    _
  $region3: #{custom_encoder_block.1} parent=0 // pred_check_branch
    %24 = sbr.rel (0) target = $region5
  $region4: #{custom_encoder_block.1} parent=0 // pred_region
    _
  $region5: #{custom_encoder_block.1} parent=0 // pred_fallthru
    _
  // Predicated region
  $region6: #{custom_encoder_block.1} parent=0 // pred_check
    _
  $region7: #{custom_encoder_block.1} parent=0 // pred_check_branch
    %26 = sbr.rel (0) target = $region9
  $region8: #{custom_encoder_block.1} parent=0 // pred_region
    _
  $region9: #{custom_encoder_block.1} parent=0 // pred_fallthru
    _
  // Predicated region
  $region10: #{custom_encoder_block.1} parent=0 // pred_check
    _
  $region11: #{custom_encoder_block.1} parent=0 // pred_check_branch
    %28 = sbr.rel (0) target = $region13
  $region12: #{custom_encoder_block.1} parent=0 // pred_region
    _
  $region13: #{custom_encoder_block.1} parent=0 // pred_fallthru
    _
  // Predicated region
  $region14: #{custom_encoder_block.1} parent=0 // pred_check
    _
  $region15: #{custom_encoder_block.1} parent=0 // pred_check_branch
    %30 = sbr.rel (0) target = $region17
  $region16: #{custom_encoder_block.1} parent=0 // pred_region
    _
  $region17: #{custom_encoder_block.1} parent=0 // pred_fallthru
    _
  // Predicated region
  $region18: #{custom_encoder_block.1} parent=0 // pred_check
    _
  $region19: #{custom_encoder_block.1} parent=0 // pred_check_branch
    %32 = sbr.rel (0) target = $region21
  $region20: #{custom_encoder_block.1} parent=0 // pred_region
    _
  $region21: #{custom_encoder_block.1} parent=0 // pred_fallthru
    _
  // Predicated region
  $region22: #{custom_encoder_block.1} parent=0 // pred_check
    _
  $region23: #{custom_encoder_block.1} parent=0 // pred_check_branch
    %34 = sbr.rel (0) target = $region25
  $region24: #{custom_encoder_block.1} parent=0 // pred_region
    _
  $region25: #{custom_encoder_block.1} parent=0 // pred_fallthru
    _
  // Predicated region
  $region26: #{custom_encoder_block.1} parent=0 // pred_check
    _
  $region27: #{custom_encoder_block.1} parent=0 // pred_check_branch
    %36 = sbr.rel (0) target = $region29
  $region28: #{custom_encoder_block.1} parent=0 // pred_region
    _
  $region29: #{custom_encoder_block.1} parent=0 // pred_fallthru
    _
  // Predicated region
  $region30: #{custom_encoder_block.1} parent=0 // pred_check
    _
  $region31: #{custom_encoder_block.1} parent=0 // pred_check_branch
    %38 = sbr.rel (0) target = $region33
  $region32: #{custom_encoder_block.1} parent=0 // pred_region
    _
  $region33: #{custom_encoder_block.1} parent=0 // pred_fallthru
    _
  // Predicated region
  $region34: #{custom_encoder_block.1} parent=0 // pred_check
    _
  $region35: #{custom_encoder_block.1} parent=0 // pred_check_branch
    %40 = sbr.rel (0) target = $region37
  $region36: #{custom_encoder_block.1} parent=0 // pred_region
    _
  $region37: #{custom_encoder_block.1} parent=0 // pred_fallthru
    _
  // Predicated region
  $region38: #{custom_encoder_block.1} parent=0 // pred_check
    _
  $region39: #{custom_encoder_block.1} parent=0 // pred_check_branch
    %42 = sbr.rel (0) target = $region41
  $region40: #{custom_encoder_block.1} parent=0 // pred_region
    _
  $region41: #{custom_encoder_block.1} parent=0 // pred_fallthru
    _
  // Predicated region
  $region42: #{custom_encoder_block.1} parent=0 // pred_check
    _
  $region43: #{custom_encoder_block.1} parent=0 // pred_check_branch
    %44 = sbr.rel (0) target = $region45
  $region44: #{custom_encoder_block.1} parent=0 // pred_region
    _
  $region45: #{custom_encoder_block.1} parent=0 // pred_fallthru
    _
  // Predicated region
  $region46: #{custom_encoder_block.1} parent=0 // pred_check
    _
  $region47: #{custom_encoder_block.1} parent=0 // pred_check_branch
    %46 = sbr.rel (0) target = $region49
  $region48: #{custom_encoder_block.1} parent=0 // pred_region
    _
  $region49: #{custom_encoder_block.1} parent=0 // pred_fallthru
    _
  // Predicated region
  $region50: #{custom_encoder_block.1} parent=0 // pred_check
    _
  $region51: #{custom_encoder_block.1} parent=0 // pred_check_branch
    %48 = sbr.rel (0) target = $region53
  $region52: #{custom_encoder_block.1} parent=0 // pred_region
    _
  $region53: #{custom_encoder_block.1} parent=0 // pred_fallthru
    _
  // Predicated region
  $region54: #{custom_encoder_block.1} parent=0 // pred_check
    _
  $region55: #{custom_encoder_block.1} parent=0 // pred_check_branch
    %50 = sbr.rel (0) target = $region57
  $region56: #{custom_encoder_block.1} parent=0 // pred_region
    _
  $region57: #{custom_encoder_block.1} parent=0 // pred_fallthru
    _
  // Predicated region
  $region58: #{custom_encoder_block.1} parent=0 // pred_check
    _
  $region59: #{custom_encoder_block.1} parent=0 // pred_check_branch
    %52 = sbr.rel (0) target = $region61
  $region60: #{custom_encoder_block.1} parent=0 // pred_region
    _
  $region61: #{custom_encoder_block.1} parent=0 // pred_fallthru
    _
  // Predicated region
  $region62: #{custom_encoder_block.1} parent=0 // pred_check
    _
  $region63: #{custom_encoder_block.1} parent=0 // pred_check_branch
    %54 = sbr.rel (0) target = $region65
  $region64: #{custom_encoder_block.1} parent=0 // pred_region
    _
  $region65: #{custom_encoder_block.1} parent=0 // pred_fallthru
    _
  %v55 = vld [vmem:[%s0] sm:$0xff]
  %v56 = vld [vmem:[%s0 + $0x8] sm:$0xff]
  %v57 = vld [vmem:[%s1] sm:$0x1]
  %v58 = vld [vmem:[%s2] sm:$0x1]
  %vm59 = vcmask 261120
  %v60 = vsel %vm59, %v55, 0.0
  %61 = vadd.xlane.f32.xlu0 %v60
  %v62 = vpop.xlane.xlu0 %61
  %v63 = vsel %vm59, %v56, 0.0
  %64 = vadd.xlane.f32.xlu0 %v63
  %v65 = vpop.xlane.xlu0 %64
  %v66 = vrcp.pop 32.0
  %v67 = vmul.f32 32.0, %v66
  %v68 = vsub.f32 1.0, %v67
  %v69 = vmul.f32 %v66, %v68
  %v70 = vadd.f32 %v66, %v69
  %vm71 = vweird.f32 %v66
  %v72 = vsel %vm71, %v66, %v70
  %v73 = vmul.f32 %v62, %v72
  %v74 = vmul.f32 %v65, %v72
  %v75 = vsub.f32 %v55, %v73
  %v76 = vsub.f32 %v56, %v74
  %v77 = vmul.f32 %v75, %v75
  %v78 = vmul.f32 %v76, %v76
  %v79 = vsel %vm59, %v77, 0.0
  %80 = vadd.xlane.f32.xlu0 %v79
  %v81 = vpop.xlane.xlu0 %80
  %v82 = vsel %vm59, %v78, 0.0
  %83 = vadd.xlane.f32.xlu0 %v82
  %v84 = vpop.xlane.xlu0 %83
  %v85 = vmul.f32 %v81, %v72
  %v86 = vmul.f32 %v84, %v72
  %v87 = vadd.f32 %v85, 1e-05
  %v88 = vadd.f32 %v86, 1e-05
  %v89 = vrsqrt.pop %v87
  %v90 = vmul.f32 %v89, %v87
  %v91 = vmul.f32 %v90, %v89
  %v92 = vmul.f32 0.5, %v91
  %v93 = vsub.f32 1.5, %v92
  %v94 = vmul.f32 %v89, %v93
  %vm95 = vweird.f32 %v87
  %vm96 = vweird.f32 %v89
  %vm97 = vmor %vm95, %vm96
  %v98 = vsel %vm97, %v89, %v94
  %v99 = vrsqrt.pop %v88
  %v100 = vmul.f32 %v99, %v88
  %v101 = vmul.f32 %v100, %v99
  %v102 = vmul.f32 0.5, %v101
  %v103 = vsub.f32 1.5, %v102
  %v104 = vmul.f32 %v99, %v103
  %vm105 = vweird.f32 %v88
  %vm106 = vweird.f32 %v99
  %vm107 = vmor %vm105, %vm106
  %v108 = vsel %vm107, %v99, %v104
  %v109 = vmul.f32 %v75, %v98
  %v110 = vmul.f32 %v76, %v108
  %v112 = vperm.slane %v57, 0
  %v114 = vmul.f32 %v109, %v112
  %v115 = vmul.f32 %v110, %v112
  %v117 = vperm.slane %v58, 0
  %v119 = vadd.f32 %v114, %v117
  %v120 = vadd.f32 %v115, %v117
  %v121 = vld [vmem:[%s3] sm:$0xff]
  %v122 = vld [vmem:[%s3 + $0x8] sm:$0xff]
  %v123 = vld [vmem:[%s3 + $0x10] sm:$0xff]
  %v124 = vld [vmem:[%s3 + $0x18] sm:$0xff]
  %v125 = vld [vmem:[%s4] sm:$0x1]
  %v127 = vperm.slane %v125, 0
  %v130 = vsel %vm59, %v119, 0
  %v133 = vsel %vm59, %v120, 0
  %135 = vmatpush.msra.mxu0 0.0
  %136 = vmatpush.msra.mxu0 0.0
  %137 = vmatpush.msra.mxu0 0.0
  %138 = vmatpush.msra.mxu0 0.0
  %139 = vmatpush.msra.mxu0 0.0
  %140 = vmatpush.msra.mxu0 0.0
  %141 = vmatpush.msra.mxu0 0.0
  %142 = vmatpush.msra.mxu0 0.0
  %143 = vmatpush.msra.mxu0 0.0
  %144 = vmatpush.msra.mxu0 0.0
  %145 = vmatpush.msra.mxu0 0.0
  %146 = vmatpush.msra.mxu0 0.0
  %147 = vmatpush.msra.mxu0 %v124
  %148 = vmatpush.msra.mxu0 %v123
  %149 = vmatpush.msra.mxu0 %v122
  %150 = vmatpush.msra.mxu0 %v121
  %151 = vmatmul.f32.gmra.mxu0 %v130
  %v152 = vpop.f32.mrf.mxu0
  %v153 = vadd.f32 %v127, %v152
  %154 = vmatmul.f32.gmra.mxu0 %v133
  %v155 = vpop.f32.mrf.mxu0
  %v156 = vadd.f32 %v127, %v155
  %157 = vdwg.mxu0
  %158 = vrot.lane.b32.xlu0 %v119, 32
  %v159 = vpop.permute.xlu0 %158
  %160 = vrot.lane.b32.xlu0 %v120, 32
  %v161 = vpop.permute.xlu0 %160
  %164 = vrot.lane.b32.xlu0 %v119, 64
  %v165 = vpop.permute.xlu0 %164
  %166 = vrot.lane.b32.xlu0 %v120, 64
  %v167 = vpop.permute.xlu0 %166
  %170 = vrot.lane.b32.xlu0 %v119, 96
  %v171 = vpop.permute.xlu0 %170
  %172 = vrot.lane.b32.xlu0 %v120, 96
  %v173 = vpop.permute.xlu0 %172
  %v176 = vsel %vm59, %v119, %v159
  %v177 = vsel %vm59, %v120, %v161
  %vm178 = vcmask 523264
  %v179 = vsel %vm178, %v176, %v165
  %v180 = vsel %vm178, %v177, %v167
  %vm181 = vcmask 785408
  %v182 = vsel %vm181, %v179, %v171
  %v183 = vsel %vm181, %v180, %v173
  %v184 = vlaneseq
  %v185 = vshrl.u32 %v184, 7
  %v186 = vadd.s32 %v185, 8
  %v187 = vadd.s32 %v185, 16
  %v188 = vadd.s32 %v185, 24
  %v189 = vadd.s32 %v185, 32
  %v190 = vadd.s32 %v185, 40
  %v191 = vadd.s32 %v185, 48
  %v192 = vadd.s32 %v185, 56
  %v193 = vshra.s32 %v185, 4
  %v194 = vshra.s32 %v186, 4
  %v195 = vshra.s32 %v187, 4
  %v196 = vshra.s32 %v188, 4
  %v197 = vshra.s32 %v189, 4
  %v198 = vshra.s32 %v190, 4
  %v199 = vshra.s32 %v191, 4
  %v200 = vshra.s32 %v192, 4
  %v201 = vlaneseq
  %v202 = vand.u32 %v201, 127
  %v203 = vshra.s32 %v202, 5
  %vm204 = vcmp.eq.s32.totalorder %v193, %v203
  %vm205 = vcmp.eq.s32.totalorder %v194, %v203
  %vm206 = vcmp.eq.s32.totalorder %v195, %v203
  %vm207 = vcmp.eq.s32.totalorder %v196, %v203
  %vm208 = vcmp.eq.s32.totalorder %v197, %v203
  %vm209 = vcmp.eq.s32.totalorder %v198, %v203
  %vm210 = vcmp.eq.s32.totalorder %v199, %v203
  %vm211 = vcmp.eq.s32.totalorder %v200, %v203
  %v212 = vsel %vm204, %v182, 0.0
  %v213 = vsel %vm205, %v183, 0.0
  %v214 = vsel %vm206, %v182, 0.0
  %v215 = vsel %vm207, %v183, 0.0
  %v216 = vsel %vm208, %v182, 0.0
  %v217 = vsel %vm209, %v183, 0.0
  %v218 = vsel %vm210, %v182, 0.0
  %v219 = vsel %vm211, %v183, 0.0
  %v220 = vld [vmem:[%s5] sm:$0xff]
  %v221 = vld [vmem:[%s5 + $0x8] sm:$0xff]
  %v222 = vld [vmem:[%s5 + $0x10] sm:$0xff]
  %v223 = vld [vmem:[%s5 + $0x18] sm:$0xff]
  %v224 = vld [vmem:[%s5 + $0x20] sm:$0xff]
  %v225 = vld [vmem:[%s5 + $0x28] sm:$0xff]
  %v226 = vld [vmem:[%s5 + $0x30] sm:$0xff]
  %v227 = vld [vmem:[%s5 + $0x38] sm:$0xff]
  %v228 = vld [vmem:[%s5 + $0x40] sm:$0xff]
  %v229 = vld [vmem:[%s5 + $0x48] sm:$0xff]
  %v230 = vld [vmem:[%s5 + $0x50] sm:$0xff]
  %v231 = vld [vmem:[%s5 + $0x58] sm:$0xff]
  %v232 = vld [vmem:[%s5 + $0x60] sm:$0xff]
  %v233 = vld [vmem:[%s5 + $0x68] sm:$0xff]
  %v234 = vld [vmem:[%s5 + $0x70] sm:$0xff]
  %v235 = vld [vmem:[%s5 + $0x78] sm:$0xff]
  %v236 = vld [vmem:[%s6] sm:$0xff]
  %v237 = vld [vmem:[%s6 + $0x8] sm:$0xff]
  %v238 = vld [vmem:[%s6 + $0x10] sm:$0xff]
  %v239 = vld [vmem:[%s6 + $0x18] sm:$0xff]
  %v240 = vld [vmem:[%s6 + $0x20] sm:$0xff]
  %v241 = vld [vmem:[%s6 + $0x28] sm:$0xff]
  %v242 = vld [vmem:[%s6 + $0x30] sm:$0xff]
  %v243 = vld [vmem:[%s6 + $0x38] sm:$0xff]
  %244 = vmatpush.msra.mxu0 %v235
  %245 = vmatpush.msra.mxu0 %v234
  %246 = vmatpush.msra.mxu0 %v233
  %247 = vmatpush.msra.mxu0 %v232
  %248 = vmatpush.msra.mxu0 %v231
  %249 = vmatpush.msra.mxu0 %v230
  %250 = vmatpush.msra.mxu0 %v229
  %251 = vmatpush.msra.mxu0 %v228
  %252 = vmatpush.msra.mxu0 %v227
  %253 = vmatpush.msra.mxu0 %v226
  %254 = vmatpush.msra.mxu0 %v225
  %255 = vmatpush.msra.mxu0 %v224
  %256 = vmatpush.msra.mxu0 %v223
  %257 = vmatpush.msra.mxu0 %v222
  %258 = vmatpush.msra.mxu0 %v221
  %259 = vmatpush.msra.mxu0 %v220
  %260 = vmatmul.f32.gmra.mxu0 %v212
  %v261 = vpop.f32.mrf.mxu0
  %v262 = vadd.f32 %v236, %v261
  %263 = vmatmul.f32.gmra.mxu0 %v213
  %v264 = vpop.f32.mrf.mxu0
  %v265 = vadd.f32 %v237, %v264
  %266 = vmatmul.f32.gmra.mxu0 %v214
  %v267 = vpop.f32.mrf.mxu0
  %v268 = vadd.f32 %v238, %v267
  %269 = vmatmul.f32.gmra.mxu0 %v215
  %v270 = vpop.f32.mrf.mxu0
  %v271 = vadd.f32 %v239, %v270
  %272 = vmatmul.f32.gmra.mxu0 %v216
  %v273 = vpop.f32.mrf.mxu0
  %v274 = vadd.f32 %v240, %v273
  %275 = vmatmul.f32.gmra.mxu0 %v217
  %v276 = vpop.f32.mrf.mxu0
  %v277 = vadd.f32 %v241, %v276
  %278 = vmatmul.f32.gmra.mxu0 %v218
  %v279 = vpop.f32.mrf.mxu0
  %v280 = vadd.f32 %v242, %v279
  %281 = vmatmul.f32.gmra.mxu0 %v219
  %v282 = vpop.f32.mrf.mxu0
  %v283 = vadd.f32 %v243, %v282
  %284 = vdwg.mxu0
  %v285 = vld [vmem:[%s7] sm:$0xff]
  %vm286 = vcmask 64512
  %v288 = vsel %vm286, %v262, 0
  %v291 = vsel %vm286, %v265, 0
  %v294 = vsel %vm286, %v268, 0
  %v297 = vsel %vm286, %v271, 0
  %v300 = vsel %vm286, %v274, 0
  %v303 = vsel %vm286, %v277, 0
  %v306 = vsel %vm286, %v280, 0
  %v309 = vsel %vm286, %v283, 0
  %311 = vmatpush.msra.mxu0 0.0
  %312 = vmatpush.msra.mxu0 0.0
  %313 = vmatpush.msra.mxu0 0.0
  %314 = vmatpush.msra.mxu0 0.0
  %315 = vmatpush.msra.mxu0 0.0
  %316 = vmatpush.msra.mxu0 0.0
  %317 = vmatpush.msra.mxu0 0.0
  %318 = vmatpush.msra.mxu0 0.0
  %319 = vmatpush.msra.mxu0 0.0
  %320 = vmatpush.msra.mxu0 0.0
  %321 = vmatpush.msra.mxu0 0.0
  %322 = vmatpush.msra.mxu0 0.0
  %323 = vmatpush.msra.mxu0 0.0
  %324 = vmatpush.msra.mxu0 0.0
  %325 = vmatpush.msra.mxu0 0.0
  %326 = vmatpush.msra.mxu0 %v285
  %327 = vmatmul.f32.gmra.mxu0 %v288
  %v328 = vpop.f32.mrf.mxu0
  %v329 = vadd.f32 0.0, %v328
  %330 = vmatmul.f32.gmra.mxu0 %v291
  %v331 = vpop.f32.mrf.mxu0
  %v332 = vadd.f32 0.0, %v331
  %333 = vmatmul.f32.gmra.mxu0 %v294
  %v334 = vpop.f32.mrf.mxu0
  %v335 = vadd.f32 0.0, %v334
  %336 = vmatmul.f32.gmra.mxu0 %v297
  %v337 = vpop.f32.mrf.mxu0
  %v338 = vadd.f32 0.0, %v337
  %339 = vmatmul.f32.gmra.mxu0 %v300
  %v340 = vpop.f32.mrf.mxu0
  %v341 = vadd.f32 0.0, %v340
  %342 = vmatmul.f32.gmra.mxu0 %v303
  %v343 = vpop.f32.mrf.mxu0
  %v344 = vadd.f32 0.0, %v343
  %345 = vmatmul.f32.gmra.mxu0 %v306
  %v346 = vpop.f32.mrf.mxu0
  %v347 = vadd.f32 0.0, %v346
  %348 = vmatmul.f32.gmra.mxu0 %v309
  %v349 = vpop.f32.mrf.mxu0
  %v350 = vadd.f32 0.0, %v349
  %351 = vdwg.mxu0
  %v352 = vrot.slane %v329, 1
  %v353 = vrot.slane %v332, 1
  %v354 = vrot.slane %v335, 1
  %v355 = vrot.slane %v338, 1
  %v356 = vrot.slane %v341, 1
  %v357 = vrot.slane %v344, 1
  %v358 = vrot.slane %v347, 1
  %v359 = vrot.slane %v350, 1
  %vm360 = vcmp.lt.s32.totalorder %v185, 7
  %v361 = vsel %vm360, %v358, %v359
  %v362 = vsel %vm360, %v357, %v358
  %v363 = vsel %vm360, %v356, %v357
  %v364 = vsel %vm360, %v355, %v356
  %v365 = vsel %vm360, %v354, %v355
  %v366 = vsel %vm360, %v353, %v354
  %v367 = vsel %vm360, %v352, %v353
  %v368 = vsel %vm360, %v359, %v352
  %377 = vrot.lane.b32.xlu0 %v367, 9
  %v378 = vpop.permute.xlu0 %377
  %379 = vrot.lane.b32.xlu0 %v366, 9
  %v380 = vpop.permute.xlu0 %379
  %381 = vrot.lane.b32.xlu0 %v365, 9
  %v382 = vpop.permute.xlu0 %381
  %383 = vrot.lane.b32.xlu0 %v364, 9
  %v384 = vpop.permute.xlu0 %383
  %385 = vrot.lane.b32.xlu0 %v363, 9
  %v386 = vpop.permute.xlu0 %385
  %387 = vrot.lane.b32.xlu0 %v362, 9
  %v388 = vpop.permute.xlu0 %387
  %389 = vrot.lane.b32.xlu0 %v361, 9
  %v390 = vpop.permute.xlu0 %389
  %391 = vrot.lane.b32.xlu0 %v368, 9
  %v392 = vpop.permute.xlu0 %391
  %v401 = vsel %vm286, %v329, 0.0
  %v402 = vsel %vm286, %v332, 0.0
  %v403 = vsel %vm286, %v335, 0.0
  %v404 = vsel %vm286, %v338, 0.0
  %v405 = vsel %vm286, %v341, 0.0
  %v406 = vsel %vm286, %v344, 0.0
  %v407 = vsel %vm286, %v347, 0.0
  %v408 = vsel %vm286, %v350, 0.0
  %vm409 = vcmask 72704
  %v410 = vsel %vm409, %v401, %v378
  %v411 = vsel %vm409, %v402, %v380
  %v412 = vsel %vm409, %v403, %v382
  %v413 = vsel %vm409, %v404, %v384
  %v414 = vsel %vm409, %v405, %v386
  %v415 = vsel %vm409, %v406, %v388
  %v416 = vsel %vm409, %v407, %v390
  %v417 = vsel %vm409, %v408, %v392
  %vm418 = vcmask 138240
  %v419 = vsel %vm418, %v410, 0.0
  %v420 = vsel %vm418, %v411, 0.0
  %v421 = vsel %vm418, %v412, 0.0
  %v422 = vsel %vm418, %v413, 0.0
  %v423 = vsel %vm418, %v414, 0.0
  %v424 = vsel %vm418, %v415, 0.0
  %v425 = vsel %vm418, %v416, 0.0
  %v426 = vsel %vm418, %v417, 0.0
  %427 = vrot.lane.b32.xlu0 %v419, 1
  %v428 = vpop.permute.xlu0 %427
  %429 = vrot.lane.b32.xlu0 %v420, 1
  %v430 = vpop.permute.xlu0 %429
  %431 = vrot.lane.b32.xlu0 %v421, 1
  %v432 = vpop.permute.xlu0 %431
  %433 = vrot.lane.b32.xlu0 %v422, 1
  %v434 = vpop.permute.xlu0 %433
  %435 = vrot.lane.b32.xlu0 %v423, 1
  %v436 = vpop.permute.xlu0 %435
  %437 = vrot.lane.b32.xlu0 %v424, 1
  %v438 = vpop.permute.xlu0 %437
  %439 = vrot.lane.b32.xlu0 %v425, 1
  %v440 = vpop.permute.xlu0 %439
  %441 = vrot.lane.b32.xlu0 %v426, 1
  %v442 = vpop.permute.xlu0 %441
  %v443 = vand.u32 %v185, 1
  %v444 = vand.u32 %v186, 1
  %v445 = vand.u32 %v187, 1
  %v446 = vand.u32 %v188, 1
  %v447 = vand.u32 %v189, 1
  %v448 = vand.u32 %v190, 1
  %v449 = vand.u32 %v191, 1
  %v450 = vand.u32 %v192, 1
  %vm451 = vcmp.ne.s32.totalorder %v443, 0
  %vm452 = vcmp.ne.s32.totalorder %v444, 0
  %vm453 = vcmp.ne.s32.totalorder %v445, 0
  %vm454 = vcmp.ne.s32.totalorder %v446, 0
  %vm455 = vcmp.ne.s32.totalorder %v447, 0
  %vm456 = vcmp.ne.s32.totalorder %v448, 0
  %vm457 = vcmp.ne.s32.totalorder %v449, 0
  %vm458 = vcmp.ne.s32.totalorder %v450, 0
  %v459 = vsel %vm451, 1, 0
  %v460 = vsel %vm452, 1, 0
  %v461 = vsel %vm453, 1, 0
  %v462 = vsel %vm454, 1, 0
  %v463 = vsel %vm455, 1, 0
  %v464 = vsel %vm456, 1, 0
  %v465 = vsel %vm457, 1, 0
  %v466 = vsel %vm458, 1, 0
  %vm467 = vcmp.eq.s32.totalorder %v459, 1
  %vm468 = vcmp.eq.s32.totalorder %v460, 1
  %vm469 = vcmp.eq.s32.totalorder %v461, 1
  %vm470 = vcmp.eq.s32.totalorder %v462, 1
  %vm471 = vcmp.eq.s32.totalorder %v463, 1
  %vm472 = vcmp.eq.s32.totalorder %v464, 1
  %vm473 = vcmp.eq.s32.totalorder %v465, 1
  %vm474 = vcmp.eq.s32.totalorder %v466, 1
  %v475 = vsel %vm467, %v428, %v419
  %v476 = vsel %vm468, %v430, %v420
  %v477 = vsel %vm469, %v432, %v421
  %v478 = vsel %vm470, %v434, %v422
  %v479 = vsel %vm471, %v436, %v423
  %v480 = vsel %vm472, %v438, %v424
  %v481 = vsel %vm473, %v440, %v425
  %v482 = vsel %vm474, %v442, %v426
  %483 = vrot.lane.b32.xlu0 %v475, 2
  %v484 = vpop.permute.xlu0 %483
  %485 = vrot.lane.b32.xlu0 %v476, 2
  %v486 = vpop.permute.xlu0 %485
  %487 = vrot.lane.b32.xlu0 %v477, 2
  %v488 = vpop.permute.xlu0 %487
  %489 = vrot.lane.b32.xlu0 %v478, 2
  %v490 = vpop.permute.xlu0 %489
  %491 = vrot.lane.b32.xlu0 %v479, 2
  %v492 = vpop.permute.xlu0 %491
  %493 = vrot.lane.b32.xlu0 %v480, 2
  %v494 = vpop.permute.xlu0 %493
  %495 = vrot.lane.b32.xlu0 %v481, 2
  %v496 = vpop.permute.xlu0 %495
  %497 = vrot.lane.b32.xlu0 %v482, 2
  %v498 = vpop.permute.xlu0 %497
  %v499 = vand.u32 %v185, 2
  %v500 = vand.u32 %v186, 2
  %v501 = vand.u32 %v187, 2
  %v502 = vand.u32 %v188, 2
  %v503 = vand.u32 %v189, 2
  %v504 = vand.u32 %v190, 2
  %v505 = vand.u32 %v191, 2
  %v506 = vand.u32 %v192, 2
  %vm507 = vcmp.ne.s32.totalorder %v499, 0
  %vm508 = vcmp.ne.s32.totalorder %v500, 0
  %vm509 = vcmp.ne.s32.totalorder %v501, 0
  %vm510 = vcmp.ne.s32.totalorder %v502, 0
  %vm511 = vcmp.ne.s32.totalorder %v503, 0
  %vm512 = vcmp.ne.s32.totalorder %v504, 0
  %vm513 = vcmp.ne.s32.totalorder %v505, 0
  %vm514 = vcmp.ne.s32.totalorder %v506, 0
  %v515 = vsel %vm507, 1, 0
  %v516 = vsel %vm508, 1, 0
  %v517 = vsel %vm509, 1, 0
  %v518 = vsel %vm510, 1, 0
  %v519 = vsel %vm511, 1, 0
  %v520 = vsel %vm512, 1, 0
  %v521 = vsel %vm513, 1, 0
  %v522 = vsel %vm514, 1, 0
  %vm523 = vcmp.eq.s32.totalorder %v515, 1
  %vm524 = vcmp.eq.s32.totalorder %v516, 1
  %vm525 = vcmp.eq.s32.totalorder %v517, 1
  %vm526 = vcmp.eq.s32.totalorder %v518, 1
  %vm527 = vcmp.eq.s32.totalorder %v519, 1
  %vm528 = vcmp.eq.s32.totalorder %v520, 1
  %vm529 = vcmp.eq.s32.totalorder %v521, 1
  %vm530 = vcmp.eq.s32.totalorder %v522, 1
  %v531 = vsel %vm523, %v484, %v475
  %v532 = vsel %vm524, %v486, %v476
  %v533 = vsel %vm525, %v488, %v477
  %v534 = vsel %vm526, %v490, %v478
  %v535 = vsel %vm527, %v492, %v479
  %v536 = vsel %vm528, %v494, %v480
  %v537 = vsel %vm529, %v496, %v481
  %v538 = vsel %vm530, %v498, %v482
  %539 = vrot.lane.b32.xlu0 %v531, 4
  %v540 = vpop.permute.xlu0 %539
  %541 = vrot.lane.b32.xlu0 %v532, 4
  %v542 = vpop.permute.xlu0 %541
  %543 = vrot.lane.b32.xlu0 %v533, 4
  %v544 = vpop.permute.xlu0 %543
  %545 = vrot.lane.b32.xlu0 %v534, 4
  %v546 = vpop.permute.xlu0 %545
  %547 = vrot.lane.b32.xlu0 %v535, 4
  %v548 = vpop.permute.xlu0 %547
  %549 = vrot.lane.b32.xlu0 %v536, 4
  %v550 = vpop.permute.xlu0 %549
  %551 = vrot.lane.b32.xlu0 %v537, 4
  %v552 = vpop.permute.xlu0 %551
  %553 = vrot.lane.b32.xlu0 %v538, 4
  %v554 = vpop.permute.xlu0 %553
  %v555 = vand.u32 %v185, 4
  %v556 = vand.u32 %v186, 4
  %v557 = vand.u32 %v187, 4
  %v558 = vand.u32 %v188, 4
  %v559 = vand.u32 %v189, 4
  %v560 = vand.u32 %v190, 4
  %v561 = vand.u32 %v191, 4
  %v562 = vand.u32 %v192, 4
  %vm563 = vcmp.ne.s32.totalorder %v555, 0
  %vm564 = vcmp.ne.s32.totalorder %v556, 0
  %vm565 = vcmp.ne.s32.totalorder %v557, 0
  %vm566 = vcmp.ne.s32.totalorder %v558, 0
  %vm567 = vcmp.ne.s32.totalorder %v559, 0
  %vm568 = vcmp.ne.s32.totalorder %v560, 0
  %vm569 = vcmp.ne.s32.totalorder %v561, 0
  %vm570 = vcmp.ne.s32.totalorder %v562, 0
  %v571 = vsel %vm563, 1, 0
  %v572 = vsel %vm564, 1, 0
  %v573 = vsel %vm565, 1, 0
  %v574 = vsel %vm566, 1, 0
  %v575 = vsel %vm567, 1, 0
  %v576 = vsel %vm568, 1, 0
  %v577 = vsel %vm569, 1, 0
  %v578 = vsel %vm570, 1, 0
  %vm579 = vcmp.eq.s32.totalorder %v571, 1
  %vm580 = vcmp.eq.s32.totalorder %v572, 1
  %vm581 = vcmp.eq.s32.totalorder %v573, 1
  %vm582 = vcmp.eq.s32.totalorder %v574, 1
  %vm583 = vcmp.eq.s32.totalorder %v575, 1
  %vm584 = vcmp.eq.s32.totalorder %v576, 1
  %vm585 = vcmp.eq.s32.totalorder %v577, 1
  %vm586 = vcmp.eq.s32.totalorder %v578, 1
  %v587 = vsel %vm579, %v540, %v531
  %v588 = vsel %vm580, %v542, %v532
  %v589 = vsel %vm581, %v544, %v533
  %v590 = vsel %vm582, %v546, %v534
  %v591 = vsel %vm583, %v548, %v535
  %v592 = vsel %vm584, %v550, %v536
  %v593 = vsel %vm585, %v552, %v537
  %v594 = vsel %vm586, %v554, %v538
  %603 = vrot.lane.b32.xlu0 %v587, 121
  %v604 = vpop.permute.xlu0 %603
  %605 = vrot.lane.b32.xlu0 %v588, 121
  %v606 = vpop.permute.xlu0 %605
  %607 = vrot.lane.b32.xlu0 %v589, 121
  %v608 = vpop.permute.xlu0 %607
  %609 = vrot.lane.b32.xlu0 %v590, 121
  %v610 = vpop.permute.xlu0 %609
  %611 = vrot.lane.b32.xlu0 %v591, 121
  %v612 = vpop.permute.xlu0 %611
  %613 = vrot.lane.b32.xlu0 %v592, 121
  %v614 = vpop.permute.xlu0 %613
  %615 = vrot.lane.b32.xlu0 %v593, 121
  %v616 = vpop.permute.xlu0 %615
  %617 = vrot.lane.b32.xlu0 %v594, 121
  %v618 = vpop.permute.xlu0 %617
  %627 = vrot.lane.b32.xlu0 %v587, 1
  %v628 = vpop.permute.xlu0 %627
  %629 = vrot.lane.b32.xlu0 %v588, 1
  %v630 = vpop.permute.xlu0 %629
  %631 = vrot.lane.b32.xlu0 %v589, 1
  %v632 = vpop.permute.xlu0 %631
  %633 = vrot.lane.b32.xlu0 %v590, 1
  %v634 = vpop.permute.xlu0 %633
  %635 = vrot.lane.b32.xlu0 %v591, 1
  %v636 = vpop.permute.xlu0 %635
  %637 = vrot.lane.b32.xlu0 %v592, 1
  %v638 = vpop.permute.xlu0 %637
  %639 = vrot.lane.b32.xlu0 %v593, 1
  %v640 = vpop.permute.xlu0 %639
  %641 = vrot.lane.b32.xlu0 %v594, 1
  %v642 = vpop.permute.xlu0 %641
  %651 = vrot.lane.b32.xlu0 %v587, 9
  %v652 = vpop.permute.xlu0 %651
  %653 = vrot.lane.b32.xlu0 %v588, 9
  %v654 = vpop.permute.xlu0 %653
  %655 = vrot.lane.b32.xlu0 %v589, 9
  %v656 = vpop.permute.xlu0 %655
  %657 = vrot.lane.b32.xlu0 %v590, 9
  %v658 = vpop.permute.xlu0 %657
  %659 = vrot.lane.b32.xlu0 %v591, 9
  %v660 = vpop.permute.xlu0 %659
  %661 = vrot.lane.b32.xlu0 %v592, 9
  %v662 = vpop.permute.xlu0 %661
  %663 = vrot.lane.b32.xlu0 %v593, 9
  %v664 = vpop.permute.xlu0 %663
  %665 = vrot.lane.b32.xlu0 %v594, 9
  %v666 = vpop.permute.xlu0 %665
  %675 = vrot.lane.b32.xlu0 %v587, 17
  %v676 = vpop.permute.xlu0 %675
  %677 = vrot.lane.b32.xlu0 %v588, 17
  %v678 = vpop.permute.xlu0 %677
  %679 = vrot.lane.b32.xlu0 %v589, 17
  %v680 = vpop.permute.xlu0 %679
  %681 = vrot.lane.b32.xlu0 %v590, 17
  %v682 = vpop.permute.xlu0 %681
  %683 = vrot.lane.b32.xlu0 %v591, 17
  %v684 = vpop.permute.xlu0 %683
  %685 = vrot.lane.b32.xlu0 %v592, 17
  %v686 = vpop.permute.xlu0 %685
  %687 = vrot.lane.b32.xlu0 %v593, 17
  %v688 = vpop.permute.xlu0 %687
  %689 = vrot.lane.b32.xlu0 %v594, 17
  %v690 = vpop.permute.xlu0 %689
  %699 = vrot.lane.b32.xlu0 %v587, 25
  %v700 = vpop.permute.xlu0 %699
  %701 = vrot.lane.b32.xlu0 %v588, 25
  %v702 = vpop.permute.xlu0 %701
  %703 = vrot.lane.b32.xlu0 %v589, 25
  %v704 = vpop.permute.xlu0 %703
  %705 = vrot.lane.b32.xlu0 %v590, 25
  %v706 = vpop.permute.xlu0 %705
  %707 = vrot.lane.b32.xlu0 %v591, 25
  %v708 = vpop.permute.xlu0 %707
  %709 = vrot.lane.b32.xlu0 %v592, 25
  %v710 = vpop.permute.xlu0 %709
  %711 = vrot.lane.b32.xlu0 %v593, 25
  %v712 = vpop.permute.xlu0 %711
  %713 = vrot.lane.b32.xlu0 %v594, 25
  %v714 = vpop.permute.xlu0 %713
  %723 = vrot.lane.b32.xlu0 %v587, 33
  %v724 = vpop.permute.xlu0 %723
  %725 = vrot.lane.b32.xlu0 %v588, 33
  %v726 = vpop.permute.xlu0 %725
  %727 = vrot.lane.b32.xlu0 %v589, 33
  %v728 = vpop.permute.xlu0 %727
  %729 = vrot.lane.b32.xlu0 %v590, 33
  %v730 = vpop.permute.xlu0 %729
  %731 = vrot.lane.b32.xlu0 %v591, 33
  %v732 = vpop.permute.xlu0 %731
  %733 = vrot.lane.b32.xlu0 %v592, 33
  %v734 = vpop.permute.xlu0 %733
  %735 = vrot.lane.b32.xlu0 %v593, 33
  %v736 = vpop.permute.xlu0 %735
  %737 = vrot.lane.b32.xlu0 %v594, 33
  %v738 = vpop.permute.xlu0 %737
  %747 = vrot.lane.b32.xlu0 %v587, 41
  %v748 = vpop.permute.xlu0 %747
  %749 = vrot.lane.b32.xlu0 %v588, 41
  %v750 = vpop.permute.xlu0 %749
  %751 = vrot.lane.b32.xlu0 %v589, 41
  %v752 = vpop.permute.xlu0 %751
  %753 = vrot.lane.b32.xlu0 %v590, 41
  %v754 = vpop.permute.xlu0 %753
  %755 = vrot.lane.b32.xlu0 %v591, 41
  %v756 = vpop.permute.xlu0 %755
  %757 = vrot.lane.b32.xlu0 %v592, 41
  %v758 = vpop.permute.xlu0 %757
  %759 = vrot.lane.b32.xlu0 %v593, 41
  %v760 = vpop.permute.xlu0 %759
  %761 = vrot.lane.b32.xlu0 %v594, 41
  %v762 = vpop.permute.xlu0 %761
  %771 = vrot.lane.b32.xlu0 %v587, 49
  %v772 = vpop.permute.xlu0 %771
  %773 = vrot.lane.b32.xlu0 %v588, 49
  %v774 = vpop.permute.xlu0 %773
  %775 = vrot.lane.b32.xlu0 %v589, 49
  %v776 = vpop.permute.xlu0 %775
  %777 = vrot.lane.b32.xlu0 %v590, 49
  %v778 = vpop.permute.xlu0 %777
  %779 = vrot.lane.b32.xlu0 %v591, 49
  %v780 = vpop.permute.xlu0 %779
  %781 = vrot.lane.b32.xlu0 %v592, 49
  %v782 = vpop.permute.xlu0 %781
  %783 = vrot.lane.b32.xlu0 %v593, 49
  %v784 = vpop.permute.xlu0 %783
  %785 = vrot.lane.b32.xlu0 %v594, 49
  %v786 = vpop.permute.xlu0 %785
  %v795 = vsel %vm286, %v604, %v628
  %v796 = vsel %vm286, %v606, %v630
  %v797 = vsel %vm286, %v608, %v632
  %v798 = vsel %vm286, %v610, %v634
  %v799 = vsel %vm286, %v612, %v636
  %v800 = vsel %vm286, %v614, %v638
  %v801 = vsel %vm286, %v616, %v640
  %v802 = vsel %vm286, %v618, %v642
  %vm803 = vcmask 130048
  %v804 = vsel %vm803, %v795, %v652
  %v805 = vsel %vm803, %v796, %v654
  %v806 = vsel %vm803, %v797, %v656
  %v807 = vsel %vm803, %v798, %v658
  %v808 = vsel %vm803, %v799, %v660
  %v809 = vsel %vm803, %v800, %v662
  %v810 = vsel %vm803, %v801, %v664
  %v811 = vsel %vm803, %v802, %v666
  %vm812 = vcmask 195584
  %v813 = vsel %vm812, %v804, %v676
  %v814 = vsel %vm812, %v805, %v678
  %v815 = vsel %vm812, %v806, %v680
  %v816 = vsel %vm812, %v807, %v682
  %v817 = vsel %vm812, %v808, %v684
  %v818 = vsel %vm812, %v809, %v686
  %v819 = vsel %vm812, %v810, %v688
  %v820 = vsel %vm812, %v811, %v690
  %v821 = vsel %vm59, %v813, %v700
  %v822 = vsel %vm59, %v814, %v702
  %v823 = vsel %vm59, %v815, %v704
  %v824 = vsel %vm59, %v816, %v706
  %v825 = vsel %vm59, %v817, %v708
  %v826 = vsel %vm59, %v818, %v710
  %v827 = vsel %vm59, %v819, %v712
  %v828 = vsel %vm59, %v820, %v714
  %vm829 = vcmask 326656
  %v830 = vsel %vm829, %v821, %v724
  %v831 = vsel %vm829, %v822, %v726
  %v832 = vsel %vm829, %v823, %v728
  %v833 = vsel %vm829, %v824, %v730
  %v834 = vsel %vm829, %v825, %v732
  %v835 = vsel %vm829, %v826, %v734
  %v836 = vsel %vm829, %v827, %v736
  %v837 = vsel %vm829, %v828, %v738
  %vm838 = vcmask 392192
  %v839 = vsel %vm838, %v830, %v748
  %v840 = vsel %vm838, %v831, %v750
  %v841 = vsel %vm838, %v832, %v752
  %v842 = vsel %vm838, %v833, %v754
  %v843 = vsel %vm838, %v834, %v756
  %v844 = vsel %vm838, %v835, %v758
  %v845 = vsel %vm838, %v836, %v760
  %v846 = vsel %vm838, %v837, %v762
  %vm847 = vcmask 457728
  %v848 = vsel %vm847, %v839, %v772
  %v849 = vsel %vm847, %v840, %v774
  %v850 = vsel %vm847, %v841, %v776
  %v851 = vsel %vm847, %v842, %v778
  %v852 = vsel %vm847, %v843, %v780
  %v853 = vsel %vm847, %v844, %v782
  %v854 = vsel %vm847, %v845, %v784
  %v855 = vsel %vm847, %v846, %v786
  %856 = vrot.lane.b32.xlu0 %v262, 120
  %v857 = vpop.permute.xlu0 %856
  %858 = vrot.lane.b32.xlu0 %v265, 120
  %v859 = vpop.permute.xlu0 %858
  %860 = vrot.lane.b32.xlu0 %v268, 120
  %v861 = vpop.permute.xlu0 %860
  %862 = vrot.lane.b32.xlu0 %v271, 120
  %v863 = vpop.permute.xlu0 %862
  %864 = vrot.lane.b32.xlu0 %v274, 120
  %v865 = vpop.permute.xlu0 %864
  %866 = vrot.lane.b32.xlu0 %v277, 120
  %v867 = vpop.permute.xlu0 %866
  %868 = vrot.lane.b32.xlu0 %v280, 120
  %v869 = vpop.permute.xlu0 %868
  %870 = vrot.lane.b32.xlu0 %v283, 120
  %v871 = vpop.permute.xlu0 %870
  %v872 = vsel %vm286, %v857, 0
  %v874 = vsel %vm286, %v859, 0
  %v876 = vsel %vm286, %v861, 0
  %v878 = vsel %vm286, %v863, 0
  %v880 = vsel %vm286, %v865, 0
  %v882 = vsel %vm286, %v867, 0
  %v884 = vsel %vm286, %v869, 0
  %v886 = vsel %vm286, %v871, 0
  %888 = vmatpush.xpose.msra.mxu0 0.0
  %889 = vmatpush.xpose.msra.mxu0 0.0
  %890 = vmatpush.xpose.msra.mxu0 0.0
  %891 = vmatpush.xpose.msra.mxu0 0.0
  %892 = vmatpush.xpose.msra.mxu0 0.0
  %893 = vmatpush.xpose.msra.mxu0 0.0
  %894 = vmatpush.xpose.msra.mxu0 0.0
  %895 = vmatpush.xpose.msra.mxu0 0.0
  %896 = vmatpush.xpose.msra.mxu0 %v886
  %897 = vmatpush.xpose.msra.mxu0 %v884
  %898 = vmatpush.xpose.msra.mxu0 %v882
  %899 = vmatpush.xpose.msra.mxu0 %v880
  %900 = vmatpush.xpose.msra.mxu0 %v878
  %901 = vmatpush.xpose.msra.mxu0 %v876
  %902 = vmatpush.xpose.msra.mxu0 %v874
  %903 = vmatpush.xpose.msra.mxu0 %v872
  %904 = vmatmul.f32.gmra.mxu0 %v288
  %v905 = vpop.f32.mrf.mxu0
  %v906 = vadd.f32 %v848, %v905
  %907 = vmatmul.f32.gmra.mxu0 %v291
  %v908 = vpop.f32.mrf.mxu0
  %v909 = vadd.f32 %v849, %v908
  %910 = vmatmul.f32.gmra.mxu0 %v294
  %v911 = vpop.f32.mrf.mxu0
  %v912 = vadd.f32 %v850, %v911
  %913 = vmatmul.f32.gmra.mxu0 %v297
  %v914 = vpop.f32.mrf.mxu0
  %v915 = vadd.f32 %v851, %v914
  %916 = vmatmul.f32.gmra.mxu0 %v300
  %v917 = vpop.f32.mrf.mxu0
  %v918 = vadd.f32 %v852, %v917
  %919 = vmatmul.f32.gmra.mxu0 %v303
  %v920 = vpop.f32.mrf.mxu0
  %v921 = vadd.f32 %v853, %v920
  %922 = vmatmul.f32.gmra.mxu0 %v306
  %v923 = vpop.f32.mrf.mxu0
  %v924 = vadd.f32 %v854, %v923
  %925 = vmatmul.f32.gmra.mxu0 %v309
  %v926 = vpop.f32.mrf.mxu0
  %v927 = vadd.f32 %v855, %v926
  %928 = vdwg.mxu0
  %v929 = vmul.f32 %v906, 0.35355338
  %v930 = vmul.f32 %v909, 0.35355338
  %v931 = vmul.f32 %v912, 0.35355338
  %v932 = vmul.f32 %v915, 0.35355338
  %v933 = vmul.f32 %v918, 0.35355338
  %v934 = vmul.f32 %v921, 0.35355338
  %v935 = vmul.f32 %v924, 0.35355338
  %v936 = vmul.f32 %v927, 0.35355338
  %v937 = vshra.s32 %v185, 3
  %v938 = vshra.s32 %v186, 3
  %v939 = vshra.s32 %v187, 3
  %v940 = vshra.s32 %v188, 3
  %v941 = vshra.s32 %v189, 3
  %v942 = vshra.s32 %v190, 3
  %v943 = vshra.s32 %v191, 3
  %v944 = vshra.s32 %v192, 3
  %v945 = vshra.s32 %v202, 3
  %vm946 = vcmp.eq.s32.totalorder %v937, %v945
  %vm947 = vcmp.eq.s32.totalorder %v938, %v945
  %vm948 = vcmp.eq.s32.totalorder %v939, %v945
  %vm949 = vcmp.eq.s32.totalorder %v940, %v945
  %vm950 = vcmp.eq.s32.totalorder %v941, %v945
  %vm951 = vcmp.eq.s32.totalorder %v942, %v945
  %vm952 = vcmp.eq.s32.totalorder %v943, %v945
  %vm953 = vcmp.eq.s32.totalorder %v944, %v945
  %v954 = vsel %vm946, %v929, -1e+30
  %v955 = vsel %vm947, %v930, -1e+30
  %v956 = vsel %vm948, %v931, -1e+30
  %v957 = vsel %vm949, %v932, -1e+30
  %v958 = vsel %vm950, %v933, -1e+30
  %v959 = vsel %vm951, %v934, -1e+30
  %v960 = vsel %vm952, %v935, -1e+30
  %v961 = vsel %vm953, %v936, -1e+30
  %v962 = vsel %vm178, %v954, -inf
  %963 = vmax.xlane.f32.xlu0 %v962
  %v964 = vpop.xlane.xlu0 %963
  %v965 = vsel %vm178, %v955, -inf
  %966 = vmax.xlane.f32.xlu0 %v965
  %v967 = vpop.xlane.xlu0 %966
  %v968 = vsel %vm178, %v956, -inf
  %969 = vmax.xlane.f32.xlu0 %v968
  %v970 = vpop.xlane.xlu0 %969
  %v971 = vsel %vm178, %v957, -inf
  %972 = vmax.xlane.f32.xlu0 %v971
  %v973 = vpop.xlane.xlu0 %972
  %v974 = vsel %vm178, %v958, -inf
  %975 = vmax.xlane.f32.xlu0 %v974
  %v976 = vpop.xlane.xlu0 %975
  %v977 = vsel %vm178, %v959, -inf
  %978 = vmax.xlane.f32.xlu0 %v977
  %v979 = vpop.xlane.xlu0 %978
  %v980 = vsel %vm178, %v960, -inf
  %981 = vmax.xlane.f32.xlu0 %v980
  %v982 = vpop.xlane.xlu0 %981
  %v983 = vsel %vm178, %v961, -inf
  %984 = vmax.xlane.f32.xlu0 %v983
  %v985 = vpop.xlane.xlu0 %984
  %v986 = vsub.f32 %v954, %v964
  %v987 = vsub.f32 %v955, %v967
  %v988 = vsub.f32 %v956, %v970
  %v989 = vsub.f32 %v957, %v973
  %v990 = vsub.f32 %v958, %v976
  %v991 = vsub.f32 %v959, %v979
  %v992 = vsub.f32 %v960, %v982
  %v993 = vsub.f32 %v961, %v985
  %v994 = vmul.f32 %v986, 1.442695
  %v995 = vpow.pop %v994
  %v996 = vmul.f32 %v987, 1.442695
  %v997 = vpow.pop %v996
  %v998 = vmul.f32 %v988, 1.442695
  %v999 = vpow.pop %v998
  %v1000 = vmul.f32 %v989, 1.442695
  %v1001 = vpow.pop %v1000
  %v1002 = vmul.f32 %v990, 1.442695
  %v1003 = vpow.pop %v1002
  %v1004 = vmul.f32 %v991, 1.442695
  %v1005 = vpow.pop %v1004
  %v1006 = vmul.f32 %v992, 1.442695
  %v1007 = vpow.pop %v1006
  %v1008 = vmul.f32 %v993, 1.442695
  %v1009 = vpow.pop %v1008
  %v1010 = vsel %vm178, %v995, 0.0
  %1011 = vadd.xlane.f32.xlu0 %v1010
  %v1012 = vpop.xlane.xlu0 %1011
  %v1013 = vsel %vm178, %v997, 0.0
  %1014 = vadd.xlane.f32.xlu0 %v1013
  %v1015 = vpop.xlane.xlu0 %1014
  %v1016 = vsel %vm178, %v999, 0.0
  %1017 = vadd.xlane.f32.xlu0 %v1016
  %v1018 = vpop.xlane.xlu0 %1017
  %v1019 = vsel %vm178, %v1001, 0.0
  %1020 = vadd.xlane.f32.xlu0 %v1019
  %v1021 = vpop.xlane.xlu0 %1020
  %v1022 = vsel %vm178, %v1003, 0.0
  %1023 = vadd.xlane.f32.xlu0 %v1022
  %v1024 = vpop.xlane.xlu0 %1023
  %v1025 = vsel %vm178, %v1005, 0.0
  %1026 = vadd.xlane.f32.xlu0 %v1025
  %v1027 = vpop.xlane.xlu0 %1026
  %v1028 = vsel %vm178, %v1007, 0.0
  %1029 = vadd.xlane.f32.xlu0 %v1028
  %v1030 = vpop.xlane.xlu0 %1029
  %v1031 = vsel %vm178, %v1009, 0.0
  %1032 = vadd.xlane.f32.xlu0 %v1031
  %v1033 = vpop.xlane.xlu0 %1032
  %v1034 = vrcp.pop %v1012
  %v1035 = vrcp.pop %v1015
  %v1036 = vrcp.pop %v1018
  %v1037 = vrcp.pop %v1021
  %v1038 = vrcp.pop %v1024
  %v1039 = vrcp.pop %v1027
  %v1040 = vrcp.pop %v1030
  %v1041 = vrcp.pop %v1033
  %v1042 = vmul.f32 %v995, %v1034
  %v1043 = vmul.f32 %v997, %v1035
  %v1044 = vmul.f32 %v999, %v1036
  %v1045 = vmul.f32 %v1001, %v1037
  %v1046 = vmul.f32 %v1003, %v1038
  %v1047 = vmul.f32 %v1005, %v1039
  %v1048 = vmul.f32 %v1007, %v1040
  %v1049 = vmul.f32 %v1009, %v1041
  %1050 = vrot.lane.b32.xlu0 %v262, 112
  %v1051 = vpop.permute.xlu0 %1050
  %1052 = vrot.lane.b32.xlu0 %v265, 112
  %v1053 = vpop.permute.xlu0 %1052
  %1054 = vrot.lane.b32.xlu0 %v268, 112
  %v1055 = vpop.permute.xlu0 %1054
  %1056 = vrot.lane.b32.xlu0 %v271, 112
  %v1057 = vpop.permute.xlu0 %1056
  %1058 = vrot.lane.b32.xlu0 %v274, 112
  %v1059 = vpop.permute.xlu0 %1058
  %1060 = vrot.lane.b32.xlu0 %v277, 112
  %v1061 = vpop.permute.xlu0 %1060
  %1062 = vrot.lane.b32.xlu0 %v280, 112
  %v1063 = vpop.permute.xlu0 %1062
  %1064 = vrot.lane.b32.xlu0 %v283, 112
  %v1065 = vpop.permute.xlu0 %1064
  %v1075 = vsel %vm178, %v1042, 0
  %v1078 = vsel %vm178, %v1043, 0
  %v1081 = vsel %vm178, %v1044, 0
  %v1084 = vsel %vm178, %v1045, 0
  %v1087 = vsel %vm178, %v1046, 0
  %v1090 = vsel %vm178, %v1047, 0
  %v1093 = vsel %vm178, %v1048, 0
  %v1096 = vsel %vm178, %v1049, 0
  %1098 = vmatpush.msra.mxu0 0.0
  %1099 = vmatpush.msra.mxu0 0.0
  %1100 = vmatpush.msra.mxu0 0.0
  %1101 = vmatpush.msra.mxu0 0.0
  %1102 = vmatpush.msra.mxu0 0.0
  %1103 = vmatpush.msra.mxu0 0.0
  %1104 = vmatpush.msra.mxu0 0.0
  %1105 = vmatpush.msra.mxu0 0.0
  %1106 = vmatpush.msra.mxu0 %v1065
  %1107 = vmatpush.msra.mxu0 %v1063
  %1108 = vmatpush.msra.mxu0 %v1061
  %1109 = vmatpush.msra.mxu0 %v1059
  %1110 = vmatpush.msra.mxu0 %v1057
  %1111 = vmatpush.msra.mxu0 %v1055
  %1112 = vmatpush.msra.mxu0 %v1053
  %1113 = vmatpush.msra.mxu0 %v1051
  %1114 = vmatmul.f32.gmra.mxu0 %v1075
  %v1115 = vpop.f32.mrf.mxu0
  %v1116 = vadd.f32 0.0, %v1115
  %1117 = vmatmul.f32.gmra.mxu0 %v1078
  %v1118 = vpop.f32.mrf.mxu0
  %v1119 = vadd.f32 0.0, %v1118
  %1120 = vmatmul.f32.gmra.mxu0 %v1081
  %v1121 = vpop.f32.mrf.mxu0
  %v1122 = vadd.f32 0.0, %v1121
  %1123 = vmatmul.f32.gmra.mxu0 %v1084
  %v1124 = vpop.f32.mrf.mxu0
  %v1125 = vadd.f32 0.0, %v1124
  %1126 = vmatmul.f32.gmra.mxu0 %v1087
  %v1127 = vpop.f32.mrf.mxu0
  %v1128 = vadd.f32 0.0, %v1127
  %1129 = vmatmul.f32.gmra.mxu0 %v1090
  %v1130 = vpop.f32.mrf.mxu0
  %v1131 = vadd.f32 0.0, %v1130
  %1132 = vmatmul.f32.gmra.mxu0 %v1093
  %v1133 = vpop.f32.mrf.mxu0
  %v1134 = vadd.f32 0.0, %v1133
  %1135 = vmatmul.f32.gmra.mxu0 %v1096
  %v1136 = vpop.f32.mrf.mxu0
  %v1137 = vadd.f32 0.0, %v1136
  %1138 = vdwg.mxu0
  %v1139 = vld [vmem:[%s8] sm:$0xff]
  %v1140 = vld [vmem:[%s8 + $0x8] sm:$0xff]
  %v1141 = vld [vmem:[%s8 + $0x10] sm:$0xff]
  %v1142 = vld [vmem:[%s8 + $0x18] sm:$0xff]
  %v1144 = vsel %vm286, %v1122, 0
  %v1147 = vsel %vm286, %v1125, 0
  %1149 = vmatpush.msra.mxu0 0.0
  %1150 = vmatpush.msra.mxu0 0.0
  %1151 = vmatpush.msra.mxu0 0.0
  %1152 = vmatpush.msra.mxu0 0.0
  %1153 = vmatpush.msra.mxu0 0.0
  %1154 = vmatpush.msra.mxu0 0.0
  %1155 = vmatpush.msra.mxu0 0.0
  %1156 = vmatpush.msra.mxu0 0.0
  %1157 = vmatpush.msra.mxu0 0.0
  %1158 = vmatpush.msra.mxu0 0.0
  %1159 = vmatpush.msra.mxu0 0.0
  %1160 = vmatpush.msra.mxu0 0.0
  %1161 = vmatpush.msra.mxu0 0.0
  %1162 = vmatpush.msra.mxu0 0.0
  %1163 = vmatpush.msra.mxu0 0.0
  %1164 = vmatpush.msra.mxu0 %v1140
  %1165 = vmatmul.f32.gmra.mxu0 %v1144
  %v1166 = vpop.f32.mrf.mxu0
  %v1167 = vadd.f32 0.0, %v1166
  %1168 = vmatmul.f32.gmra.mxu0 %v1147
  %v1169 = vpop.f32.mrf.mxu0
  %v1170 = vadd.f32 0.0, %v1169
  %1171 = vdwg.mxu0
  %v1173 = vsel %vm286, %v1116, 0
  %v1176 = vsel %vm286, %v1119, 0
  %1178 = vmatpush.msra.mxu0 0.0
  %1179 = vmatpush.msra.mxu0 0.0
  %1180 = vmatpush.msra.mxu0 0.0
  %1181 = vmatpush.msra.mxu0 0.0
  %1182 = vmatpush.msra.mxu0 0.0
  %1183 = vmatpush.msra.mxu0 0.0
  %1184 = vmatpush.msra.mxu0 0.0
  %1185 = vmatpush.msra.mxu0 0.0
  %1186 = vmatpush.msra.mxu0 0.0
  %1187 = vmatpush.msra.mxu0 0.0
  %1188 = vmatpush.msra.mxu0 0.0
  %1189 = vmatpush.msra.mxu0 0.0
  %1190 = vmatpush.msra.mxu0 0.0
  %1191 = vmatpush.msra.mxu0 0.0
  %1192 = vmatpush.msra.mxu0 0.0
  %1193 = vmatpush.msra.mxu0 %v1139
  %1194 = vmatmul.f32.gmra.mxu0 %v1173
  %v1195 = vpop.f32.mrf.mxu0
  %v1196 = vadd.f32 %v1167, %v1195
  %1197 = vmatmul.f32.gmra.mxu0 %v1176
  %v1198 = vpop.f32.mrf.mxu0
  %v1199 = vadd.f32 %v1170, %v1198
  %1200 = vdwg.mxu0
  %v1202 = vsel %vm286, %v1128, 0
  %v1205 = vsel %vm286, %v1131, 0
  %1207 = vmatpush.msra.mxu0 0.0
  %1208 = vmatpush.msra.mxu0 0.0
  %1209 = vmatpush.msra.mxu0 0.0
  %1210 = vmatpush.msra.mxu0 0.0
  %1211 = vmatpush.msra.mxu0 0.0
  %1212 = vmatpush.msra.mxu0 0.0
  %1213 = vmatpush.msra.mxu0 0.0
  %1214 = vmatpush.msra.mxu0 0.0
  %1215 = vmatpush.msra.mxu0 0.0
  %1216 = vmatpush.msra.mxu0 0.0
  %1217 = vmatpush.msra.mxu0 0.0
  %1218 = vmatpush.msra.mxu0 0.0
  %1219 = vmatpush.msra.mxu0 0.0
  %1220 = vmatpush.msra.mxu0 0.0
  %1221 = vmatpush.msra.mxu0 0.0
  %1222 = vmatpush.msra.mxu0 %v1141
  %1223 = vmatmul.f32.gmra.mxu0 %v1202
  %v1224 = vpop.f32.mrf.mxu0
  %v1225 = vadd.f32 0.0, %v1224
  %1226 = vmatmul.f32.gmra.mxu0 %v1205
  %v1227 = vpop.f32.mrf.mxu0
  %v1228 = vadd.f32 0.0, %v1227
  %1229 = vdwg.mxu0
  %v1230 = vadd.f32 %v1196, %v1225
  %v1231 = vadd.f32 %v1199, %v1228
  %v1233 = vsel %vm286, %v1134, 0
  %v1236 = vsel %vm286, %v1137, 0
  %1238 = vmatpush.msra.mxu0 0.0
  %1239 = vmatpush.msra.mxu0 0.0
  %1240 = vmatpush.msra.mxu0 0.0
  %1241 = vmatpush.msra.mxu0 0.0
  %1242 = vmatpush.msra.mxu0 0.0
  %1243 = vmatpush.msra.mxu0 0.0
  %1244 = vmatpush.msra.mxu0 0.0
  %1245 = vmatpush.msra.mxu0 0.0
  %1246 = vmatpush.msra.mxu0 0.0
  %1247 = vmatpush.msra.mxu0 0.0
  %1248 = vmatpush.msra.mxu0 0.0
  %1249 = vmatpush.msra.mxu0 0.0
  %1250 = vmatpush.msra.mxu0 0.0
  %1251 = vmatpush.msra.mxu0 0.0
  %1252 = vmatpush.msra.mxu0 0.0
  %1253 = vmatpush.msra.mxu0 %v1142
  %1254 = vmatmul.f32.gmra.mxu0 %v1233
  %v1255 = vpop.f32.mrf.mxu0
  %v1256 = vadd.f32 0.0, %v1255
  %1257 = vmatmul.f32.gmra.mxu0 %v1236
  %v1258 = vpop.f32.mrf.mxu0
  %v1259 = vadd.f32 0.0, %v1258
  %1260 = vdwg.mxu0
  %v1261 = vadd.f32 %v1230, %v1256
  %v1262 = vadd.f32 %v1231, %v1259
  %v1263 = vld [vmem:[%s9] sm:$0x1]
  %v1265 = vperm.slane %v1263, 0
  %v1267 = vadd.f32 %v1261, %v1265
  %v1268 = vadd.f32 %v1262, %v1265
  %v1269 = vadd.f32 %v1267, %v55
  %v1270 = vadd.f32 %v1268, %v56
  %v1271 = vld [vmem:[%s10] sm:$0x1]
  %v1272 = vld [vmem:[%s11] sm:$0x1]
  %v1273 = vsel %vm59, %v1269, 0.0
  %1274 = vadd.xlane.f32.xlu0 %v1273
  %v1275 = vpop.xlane.xlu0 %1274
  %v1276 = vsel %vm59, %v1270, 0.0
  %1277 = vadd.xlane.f32.xlu0 %v1276
  %v1278 = vpop.xlane.xlu0 %1277
  %v1279 = vmul.f32 %v1275, %v72
  %v1280 = vmul.f32 %v1278, %v72
  %v1281 = vsub.f32 %v1269, %v1279
  %v1282 = vsub.f32 %v1270, %v1280
  %v1283 = vmul.f32 %v1281, %v1281
  %v1284 = vmul.f32 %v1282, %v1282
  %v1285 = vsel %vm59, %v1283, 0.0
  %1286 = vadd.xlane.f32.xlu0 %v1285
  %v1287 = vpop.xlane.xlu0 %1286
  %v1288 = vsel %vm59, %v1284, 0.0
  %1289 = vadd.xlane.f32.xlu0 %v1288
  %v1290 = vpop.xlane.xlu0 %1289
  %v1291 = vmul.f32 %v1287, %v72
  %v1292 = vmul.f32 %v1290, %v72
  %v1293 = vadd.f32 %v1291, 1e-05
  %v1294 = vadd.f32 %v1292, 1e-05
  %v1295 = vrsqrt.pop %v1293
  %v1296 = vmul.f32 %v1295, %v1293
  %v1297 = vmul.f32 %v1296, %v1295
  %v1298 = vmul.f32 0.5, %v1297
  %v1299 = vsub.f32 1.5, %v1298
  %v1300 = vmul.f32 %v1295, %v1299
  %vm1301 = vweird.f32 %v1293
  %vm1302 = vweird.f32 %v1295
  %vm1303 = vmor %vm1301, %vm1302
  %v1304 = vsel %vm1303, %v1295, %v1300
  %v1305 = vrsqrt.pop %v1294
  %v1306 = vmul.f32 %v1305, %v1294
  %v1307 = vmul.f32 %v1306, %v1305
  %v1308 = vmul.f32 0.5, %v1307
  %v1309 = vsub.f32 1.5, %v1308
  %v1310 = vmul.f32 %v1305, %v1309
  %vm1311 = vweird.f32 %v1294
  %vm1312 = vweird.f32 %v1305
  %vm1313 = vmor %vm1311, %vm1312
  %v1314 = vsel %vm1313, %v1305, %v1310
  %v1315 = vmul.f32 %v1281, %v1304
  %v1316 = vmul.f32 %v1282, %v1314
  %v1318 = vperm.slane %v1271, 0
  %v1320 = vmul.f32 %v1315, %v1318
  %v1321 = vmul.f32 %v1316, %v1318
  %v1323 = vperm.slane %v1272, 0
  %v1325 = vadd.f32 %v1320, %v1323
  %v1326 = vadd.f32 %v1321, %v1323
  %v1327 = vld [vmem:[%s12] sm:$0xff]
  %v1328 = vld [vmem:[%s12 + $0x8] sm:$0xff]
  %v1329 = vld [vmem:[%s12 + $0x10] sm:$0xff]
  %v1330 = vld [vmem:[%s12 + $0x18] sm:$0xff]
  %v1331 = vld [vmem:[%s13] sm:$0x1]
  %v1333 = vperm.slane %v1331, 0
  %v1336 = vsel %vm59, %v1325, 0
  %v1339 = vsel %vm59, %v1326, 0
  %1341 = vmatpush.msra.mxu0 0.0
  %1342 = vmatpush.msra.mxu0 0.0
  %1343 = vmatpush.msra.mxu0 0.0
  %1344 = vmatpush.msra.mxu0 0.0
  %1345 = vmatpush.msra.mxu0 0.0
  %1346 = vmatpush.msra.mxu0 0.0
  %1347 = vmatpush.msra.mxu0 0.0
  %1348 = vmatpush.msra.mxu0 0.0
  %1349 = vmatpush.msra.mxu0 0.0
  %1350 = vmatpush.msra.mxu0 0.0
  %1351 = vmatpush.msra.mxu0 0.0
  %1352 = vmatpush.msra.mxu0 0.0
  %1353 = vmatpush.msra.mxu0 %v1330
  %1354 = vmatpush.msra.mxu0 %v1329
  %1355 = vmatpush.msra.mxu0 %v1328
  %1356 = vmatpush.msra.mxu0 %v1327
  %1357 = vmatmul.f32.gmra.mxu0 %v1336
  %v1358 = vpop.f32.mrf.mxu0
  %v1359 = vadd.f32 %v1333, %v1358
  %1360 = vmatmul.f32.gmra.mxu0 %v1339
  %v1361 = vpop.f32.mrf.mxu0
  %v1362 = vadd.f32 %v1333, %v1361
  %1363 = vdwg.mxu0
  %v1364 = vmul.f32 %v1359, 0.5
  %v1365 = vmul.f32 %v1362, 0.5
  %v1366 = vmul.f32 %v1359, 0.70710677
  %v1367 = vmul.f32 %v1362, 0.70710677
  %vm1368 = vcmp.ge.f32.partialorder %v1366, 0.0
  %vm1369 = vcmp.ge.f32.partialorder %v1367, 0.0
  %v1370 = vsel %vm1368, 1.0, -1.0
  %v1371 = vsel %vm1369, 1.0, -1.0
  %v1372 = vand.u32 2147483647, %v1366
  %v1373 = vand.u32 2147483647, %v1367
  %v1374 = vmul.f32 %v1372, 0.3275911
  %v1375 = vmul.f32 %v1373, 0.3275911
  %v1376 = vadd.f32 %v1374, 1.0
  %v1377 = vadd.f32 %v1375, 1.0
  %v1378 = vrcp.pop %v1376
  %v1379 = vmul.f32 %v1376, %v1378
  %v1380 = vsub.f32 1.0, %v1379
  %v1381 = vmul.f32 %v1378, %v1380
  %v1382 = vadd.f32 %v1378, %v1381
  %vm1383 = vweird.f32 %v1376
  %vm1384 = vweird.f32 %v1378
  %vm1385 = vmor %vm1383, %vm1384
  %v1386 = vsel %vm1385, %v1378, %v1382
  %v1387 = vand.u32 2147483647, %v1376
  %vm1388 = vcmp.eq.f32.partialorder %v1387, 8.507059e+37
  %v1389 = vand.u32 %v1376, 2147483648
  %v1390 = vor.u32 1.1754944e-38, %v1389
  %v1391 = vsel %vm1388, %v1390, %v1386
  %v1392 = vmul.f32 1.0, %v1391
  %v1393 = vrcp.pop %v1377
  %v1394 = vmul.f32 %v1377, %v1393
  %v1395 = vsub.f32 1.0, %v1394
  %v1396 = vmul.f32 %v1393, %v1395
  %v1397 = vadd.f32 %v1393, %v1396
  %vm1398 = vweird.f32 %v1377
  %vm1399 = vweird.f32 %v1393
  %vm1400 = vmor %vm1398, %vm1399
  %v1401 = vsel %vm1400, %v1393, %v1397
  %v1402 = vand.u32 2147483647, %v1377
  %vm1403 = vcmp.eq.f32.partialorder %v1402, 8.507059e+37
  %v1404 = vand.u32 %v1377, 2147483648
  %v1405 = vor.u32 1.1754944e-38, %v1404
  %v1406 = vsel %vm1403, %v1405, %v1401
  %v1407 = vmul.f32 1.0, %v1406
  %v1408 = vmul.f32 %v1392, 1.0614054
  %v1409 = vmul.f32 %v1407, 1.0614054
  %v1410 = vadd.f32 %v1408, -1.4531521
  %v1411 = vadd.f32 %v1409, -1.4531521
  %v1412 = vmul.f32 %v1410, %v1392
  %v1413 = vmul.f32 %v1411, %v1407
  %v1414 = vadd.f32 %v1412, 1.4214138
  %v1415 = vadd.f32 %v1413, 1.4214138
  %v1416 = vmul.f32 %v1414, %v1392
  %v1417 = vmul.f32 %v1415, %v1407
  %v1418 = vadd.f32 %v1416, -0.28449672
  %v1419 = vadd.f32 %v1417, -0.28449672
  %v1420 = vmul.f32 %v1418, %v1392
  %v1421 = vmul.f32 %v1419, %v1407
  %v1422 = vadd.f32 %v1420, 0.2548296
  %v1423 = vadd.f32 %v1421, 0.2548296
  %v1424 = vmul.f32 %v1422, %v1392
  %v1425 = vmul.f32 %v1423, %v1407
  %v1426 = vsub.f32 0.0, %v1372
  %v1427 = vsub.f32 0.0, %v1373
  %v1428 = vmul.f32 %v1426, %v1372
  %v1429 = vmul.f32 %v1427, %v1373
  %v1430 = vmul.f32 %v1428, 1.442695
  %v1431 = vpow.pop %v1430
  %v1432 = vmul.f32 %v1429, 1.442695
  %v1433 = vpow.pop %v1432
  %v1434 = vmul.f32 %v1424, %v1431
  %v1435 = vmul.f32 %v1425, %v1433
  %v1436 = vsub.f32 1.0, %v1434
  %v1437 = vsub.f32 1.0, %v1435
  %v1438 = vmul.f32 %v1370, %v1436
  %v1439 = vmul.f32 %v1371, %v1437
  %v1440 = vadd.f32 %v1438, 1.0
  %v1441 = vadd.f32 %v1439, 1.0
  %v1442 = vmul.f32 %v1364, %v1440
  %v1443 = vmul.f32 %v1365, %v1441
  %v1444 = vld [vmem:[%s14] sm:$0xff]
  %v1445 = vld [vmem:[%s14 + $0x8] sm:$0xff]
  %v1446 = vld [vmem:[%s14 + $0x10] sm:$0xff]
  %v1447 = vld [vmem:[%s14 + $0x18] sm:$0xff]
  %v1448 = vld [vmem:[%s14 + $0x20] sm:$0xff]
  %v1449 = vld [vmem:[%s14 + $0x28] sm:$0xff]
  %v1450 = vld [vmem:[%s14 + $0x30] sm:$0xff]
  %v1451 = vld [vmem:[%s14 + $0x38] sm:$0xff]
  %v1452 = vld [vmem:[%s15] sm:$0x1]
  %v1454 = vperm.slane %v1452, 0
  %v1457 = vsel %vm178, %v1442, 0
  %v1460 = vsel %vm178, %v1443, 0
  %1462 = vmatpush.msra.mxu0 0.0
  %1463 = vmatpush.msra.mxu0 0.0
  %1464 = vmatpush.msra.mxu0 0.0
  %1465 = vmatpush.msra.mxu0 0.0
  %1466 = vmatpush.msra.mxu0 0.0
  %1467 = vmatpush.msra.mxu0 0.0
  %1468 = vmatpush.msra.mxu0 0.0
  %1469 = vmatpush.msra.mxu0 0.0
  %1470 = vmatpush.msra.mxu0 %v1451
  %1471 = vmatpush.msra.mxu0 %v1450
  %1472 = vmatpush.msra.mxu0 %v1449
  %1473 = vmatpush.msra.mxu0 %v1448
  %1474 = vmatpush.msra.mxu0 %v1447
  %1475 = vmatpush.msra.mxu0 %v1446
  %1476 = vmatpush.msra.mxu0 %v1445
  %1477 = vmatpush.msra.mxu0 %v1444
  %1478 = vmatmul.f32.gmra.mxu0 %v1457
  %v1479 = vpop.f32.mrf.mxu0
  %v1480 = vadd.f32 %v1454, %v1479
  %1481 = vmatmul.f32.gmra.mxu0 %v1460
  %v1482 = vpop.f32.mrf.mxu0
  %v1483 = vadd.f32 %v1454, %v1482
  %1484 = vdwg.mxu0
  %v1485 = vadd.f32 %v1480, %v1269
  %v1486 = vadd.f32 %v1483, %v1270
  %1489 = vrot.lane.b32.xlu0 %v1269, 96
  %v1490 = vpop.permute.xlu0 %1489
  %1491 = vrot.lane.b32.xlu0 %v1270, 96
  %v1492 = vpop.permute.xlu0 %1491
  %v1495 = vsel %vm181, %v153, %v1490
  %v1496 = vsel %vm181, %v156, %v1492
  %1497 = vst [vmem:[%s16] sm:$0xff] %v1495
  %1498 = vst [vmem:[%s16 + $0x8] sm:$0xff] %v1496
  %1501 = vrot.lane.b32.xlu0 %v1485, 64
  %v1502 = vpop.permute.xlu0 %1501
  %1503 = vrot.lane.b32.xlu0 %v1486, 64
  %v1504 = vpop.permute.xlu0 %1503
  %v1507 = vsel %vm178, %v1442, %v1502
  %v1508 = vsel %vm178, %v1443, %v1504
  %v1509 = vsel %vm181, %v1507, 0.0
  %v1510 = vsel %vm181, %v1508, 0.0
  %1511 = vst [vmem:[%s17] sm:$0xff] %v1509
  %1512 = vst [vmem:[%s17 + $0x8] sm:$0xff] %v1510
  // Predicated region
  $region66: #{custom_encoder_block.1} parent=0 // pred_check
    _
  $region67: #{custom_encoder_block.1} parent=0 // pred_check_branch
    %1514 = sbr.rel (0) target = $region69
  $region68: #{custom_encoder_block.1} parent=0 // pred_region
    _
  $region69: #{custom_encoder_block.1} parent=0 // pred_fallthru
    _
  // Predicated region
  $region70: #{custom_encoder_block.1} parent=0 // pred_check
    _
  $region71: #{custom_encoder_block.1} parent=0 // pred_check_branch
    %1516 = sbr.rel (0) target = $region73
  $region72: #{custom_encoder_block.1} parent=0 // pred_region
    _
  $region73: #{custom_encoder_block.1} parent=0 // pred_fallthru
    _
  // Predicated region
  $region74: #{custom_encoder_block.1} parent=0 // pred_check
    _
  $region75: #{custom_encoder_block.1} parent=0 // pred_check_branch
    %1518 = sbr.rel (0) target = $region77
  $region76: #{custom_encoder_block.1} parent=0 // pred_region
    _
  $region77: #{custom_encoder_block.1} parent=0 // pred_fallthru
    _
  // Predicated region
  $region78: #{custom_encoder_block.1} parent=0 // pred_check
    _
  $region79: #{custom_encoder_block.1} parent=0 // pred_check_branch
    %1520 = sbr.rel (0) target = $region81
  $region80: #{custom_encoder_block.1} parent=0 // pred_region
    _
  $region81: #{custom_encoder_block.1} parent=0 // pred_fallthru
    _

</llo_original>
